<compile_context>
chip_gen: v5e
topology: v5e:2x2
jax: 0.10.0
libtpu: 0.0.40
codegen_flags: <defaults>
</compile_context>

<pallas_src>
import functools
import math

import jax
import jax.numpy as jnp
from jax.experimental import pallas as pl
from jax.experimental.pallas import tpu as pltpu


# ----------------------------------------------------------------------------
# Fused decoder-layer kernel
# ----------------------------------------------------------------------------

def _decoder_layer_kernel(
    # activations / masks
    x_ref, enc_ref, dmask_ref, emask_ref,
    # self-attention params (fused QKV weight), output projection
    wqkv_s_ref, bqkv_s_ref, wo_s_ref, bo_s_ref,
    # cross-attention params (Q from decoder stream, fused KV from encoder stream)
    wq_c_ref, bq_c_ref, wkv_c_ref, bkv_c_ref, wo_c_ref, bo_c_ref,
    # feed-forward params
    w1_ref, b1_ref, w2_ref, b2_ref,
    # layer-norm params
    g1_ref, be1_ref, g2_ref, be2_ref, g3_ref, be3_ref,
    # output
    o_ref,
    *, B, S, S_enc, H, d_k, d_v, eps,
):
    f32 = jnp.float32
    bf16 = jnp.bfloat16
    scale = 1.0 / math.sqrt(d_k)

    x = x_ref[...]        # [B*S, E]      f32
    enc = enc_ref[...]    # [B*S_enc, E]  f32
    E = x.shape[-1]

    def mm(a_f32, w_bf16_ref):
        # bf16 MXU operands, f32 accumulation.
        return jnp.dot(a_f32.astype(bf16), w_bf16_ref[...],
                       preferred_element_type=f32)

    def layer_norm(y, g_ref, b_ref):
        mu = jnp.mean(y, axis=-1, keepdims=True)
        var = jnp.mean(jnp.square(y - mu), axis=-1, keepdims=True)
        return (y - mu) * jax.lax.rsqrt(var + eps) * g_ref[...] + b_ref[...]

    def mha_context(q2d, k2d, v2d, mask, wo_ref, bo_ref, S_q, S_kv):
        # q2d: [B*S_q, H*d_k], k2d: [B*S_kv, H*d_k], v2d: [B*S_kv, H*d_v]
        # mask: [B, S_q, S_kv] additive bias (f32).
        # Head concat + output projection are folded into a sum of per-head
        # matmuls so the accumulated slab is always lane-dense [B*S_q, E].
        wo = wo_ref[...]                                     # [H*d_v, E] f32
        out = jnp.zeros((B * S_q, E), f32)
        for h in range(H):                                   # static unrolled loop
            q_h = q2d[:, h * d_k:(h + 1) * d_k].reshape(B, S_q, d_k).astype(bf16)
            k_h = k2d[:, h * d_k:(h + 1) * d_k].reshape(B, S_kv, d_k).astype(bf16)
            v_h = v2d[:, h * d_v:(h + 1) * d_v].reshape(B, S_kv, d_v).astype(bf16)
            s = jnp.einsum("bqd,bkd->bqk", q_h, k_h,
                           preferred_element_type=f32) * scale + mask
            s = s - jnp.max(s, axis=-1, keepdims=True)
            p = jnp.exp(s)
            p = p * pl.reciprocal(jnp.sum(p, axis=-1, keepdims=True), approx=True)
            o_h = jnp.einsum("bqk,bkd->bqd", p.astype(bf16), v_h,
                             preferred_element_type=f32)
            o_h = o_h.reshape(B * S_q, d_v)
            wo_h = wo[h * d_v:(h + 1) * d_v, :].astype(bf16)  # [d_v, E]
            out = out + jnp.dot(o_h.astype(bf16), wo_h, preferred_element_type=f32)
        return out + bo_ref[...]

    # ---- self-attention + residual + norm1 ----
    qkv = mm(x, wqkv_s_ref) + bqkv_s_ref[...]                # [B*S, 2*H*dk + H*dv]
    q_s = qkv[:, :H * d_k]
    k_s = qkv[:, H * d_k:2 * H * d_k]
    v_s = qkv[:, 2 * H * d_k:]
    sa = mha_context(q_s, k_s, v_s, dmask_ref[...], wo_s_ref, bo_s_ref, S, S)
    x1 = layer_norm(x + sa, g1_ref, be1_ref)

    # ---- cross-attention + residual + norm2 ----
    q_c = mm(x1, wq_c_ref) + bq_c_ref[...]                   # [B*S, H*dk]
    kv_c = mm(enc, wkv_c_ref) + bkv_c_ref[...]               # [B*S_enc, H*dk + H*dv]
    k_c = kv_c[:, :H * d_k]
    v_c = kv_c[:, H * d_k:]
    ca = mha_context(q_c, k_c, v_c, emask_ref[...], wo_c_ref, bo_c_ref, S, S_enc)
    x2 = layer_norm(x1 + ca, g2_ref, be2_ref)

    # ---- FFN, then (as in the reference) out = norm3(x) + ff(x) ----
    h1 = jnp.maximum(mm(x2, w1_ref) + b1_ref[...], 0.0)
    ff = mm(h1, w2_ref) + b2_ref[...]
    o_ref[...] = layer_norm(x2, g3_ref, be3_ref) + ff


# ----------------------------------------------------------------------------
# Wrapper
# ----------------------------------------------------------------------------

def decoder_layer(x, encoder_data, decoder_mask_bias, encoder_mask_bias, params,
                  *, n_heads, d_k, d_v):
    B, S, E = x.shape
    S_enc = encoder_data.shape[1]
    kernel = functools.partial(
        _decoder_layer_kernel,
        B=B, S=S, S_enc=S_enc, H=n_heads, d_k=d_k, d_v=d_v, eps=1e-5)

    out2d = pl.pallas_call(
        kernel,
        out_shape=jax.ShapeDtypeStruct((B * S, E), jnp.float32),
        # Whole-array blocks, single launch: everything fits in VMEM at these
        # shapes.  (At production sizes: grid over B*S rows + K-reduction axis,
        # "parallel" row semantics for v7x's two TensorCores.)
        compiler_params=pltpu.CompilerParams(vmem_limit_bytes=32 * 1024 * 1024),
    )(
        x.reshape(B * S, E),
        encoder_data.reshape(B * S_enc, E),
        decoder_mask_bias, encoder_mask_bias,
        params["wqkv_s"], params["bqkv_s"], params["wo_s"], params["bo_s"],
        params["wq_c"], params["bq_c"], params["wkv_c"], params["bkv_c"],
        params["wo_c"], params["bo_c"],
        params["ff_w1"], params["ff_b1"], params["ff_w2"], params["ff_b2"],
        params["norm1_g"], params["norm1_b"],
        params["norm2_g"], params["norm2_b"],
        params["norm3_g"], params["norm3_b"],
    )
    return out2d.reshape(B, S, E)


# ----------------------------------------------------------------------------
# Pure-JAX reference (same math / precision policy) for correctness checking
# ----------------------------------------------------------------------------

def decoder_layer_ref(x, encoder_data, dmask, emask, params, *, n_heads, d_k, d_v,
                      eps=1e-5):
    f32, bf16 = jnp.float32, jnp.bfloat16
    B, S, E = x.shape
    S_enc = encoder_data.shape[1]
    H = n_heads
    scale = 1.0 / math.sqrt(d_k)
    x2d = x.reshape(B * S, E)
    enc2d = encoder_data.reshape(B * S_enc, E)

    def mm(a, w):
        return jnp.dot(a.astype(bf16), w.astype(bf16), preferred_element_type=f32)

    def ln(y, g, b):
        mu = jnp.mean(y, axis=-1, keepdims=True)
        var = jnp.mean(jnp.square(y - mu), axis=-1, keepdims=True)
        return (y - mu) * jax.lax.rsqrt(var + eps) * g + b

    def mha(q2d, k2d, v2d, mask, wo, bo, S_q, S_kv):
        out = jnp.zeros((B * S_q, E), f32)
        for h in range(H):
            q_h = q2d[:, h * d_k:(h + 1) * d_k].reshape(B, S_q, d_k).astype(bf16)
            k_h = k2d[:, h * d_k:(h + 1) * d_k].reshape(B, S_kv, d_k).astype(bf16)
            v_h = v2d[:, h * d_v:(h + 1) * d_v].reshape(B, S_kv, d_v).astype(bf16)
            s = jnp.einsum("bqd,bkd->bqk", q_h, k_h,
                           preferred_element_type=f32) * scale + mask
            p = jax.nn.softmax(s, axis=-1)
            o_h = jnp.einsum("bqk,bkd->bqd", p.astype(bf16), v_h,
                             preferred_element_type=f32).reshape(B * S_q, d_v)
            out = out + jnp.dot(o_h.astype(bf16),
                                wo[h * d_v:(h + 1) * d_v, :].astype(bf16),
                                preferred_element_type=f32)
        return out + bo

    p = params
    qkv = mm(x2d, p["wqkv_s"]) + p["bqkv_s"]
    sa = mha(qkv[:, :H * d_k], qkv[:, H * d_k:2 * H * d_k], qkv[:, 2 * H * d_k:],
             dmask, p["wo_s"], p["bo_s"], S, S)
    x1 = ln(x2d + sa, p["norm1_g"], p["norm1_b"])
    q_c = mm(x1, p["wq_c"]) + p["bq_c"]
    kv = mm(enc2d, p["wkv_c"]) + p["bkv_c"]
    ca = mha(q_c, kv[:, :H * d_k], kv[:, H * d_k:], emask,
             p["wo_c"], p["bo_c"], S, S_enc)
    x2 = ln(x1 + ca, p["norm2_g"], p["norm2_b"])
    h1 = jnp.maximum(mm(x2, p["ff_w1"]) + p["ff_b1"], 0.0)
    ff = mm(h1, p["ff_w2"]) + p["ff_b2"]
    out = ln(x2, p["norm3_g"], p["norm3_b"]) + ff
    return out.reshape(B, S, E)


# ----------------------------------------------------------------------------
# Deterministic parameter init (fused QKV / KV weights; matmul weights in bf16)
# ----------------------------------------------------------------------------

def init_params(key, E, H, d_k, d_v, d_inner):
    ks = jax.random.split(key, 10)
    sc = 0.02

    def w(k, shape):
        return sc * jax.random.normal(k, shape, jnp.float32)

    wq_s, wk_s, wv_s = w(ks[0], (E, H * d_k)), w(ks[1], (E, H * d_k)), w(ks[2], (E, H * d_v))
    wo_s = w(ks[3], (H * d_v, E))
    wq_c, wk_c, wv_c = w(ks[4], (E, H * d_k)), w(ks[5], (E, H * d_k)), w(ks[6], (E, H * d_v))
    wo_c = w(ks[7], (H * d_v, E))
    ff_w1, ff_w2 = w(ks[8], (E, d_inner)), w(ks[9], (d_inner, E))

    return {
        # matmul weights in bf16 (MXU operands); wo kept f32 so per-head row
        # slices stay 8-sublane aligned; biases / LayerNorm params in f32.
        "wqkv_s": jnp.concatenate([wq_s, wk_s, wv_s], axis=1).astype(jnp.bfloat16),
        "bqkv_s": jnp.zeros((1, 2 * H * d_k + H * d_v), jnp.float32),
        "wo_s": wo_s, "bo_s": jnp.zeros((1, E), jnp.float32),
        "wq_c": wq_c.astype(jnp.bfloat16), "bq_c": jnp.zeros((1, H * d_k), jnp.float32),
        "wkv_c": jnp.concatenate([wk_c, wv_c], axis=1).astype(jnp.bfloat16),
        "bkv_c": jnp.zeros((1, H * d_k + H * d_v), jnp.float32),
        "wo_c": wo_c, "bo_c": jnp.zeros((1, E), jnp.float32),
        "ff_w1": ff_w1.astype(jnp.bfloat16), "ff_b1": jnp.zeros((1, d_inner), jnp.float32),
        "ff_w2": ff_w2.astype(jnp.bfloat16), "ff_b2": jnp.zeros((1, E), jnp.float32),
        "norm1_g": jnp.ones((1, E), jnp.float32), "norm1_b": jnp.zeros((1, E), jnp.float32),
        "norm2_g": jnp.ones((1, E), jnp.float32), "norm2_b": jnp.zeros((1, E), jnp.float32),
        "norm3_g": jnp.ones((1, E), jnp.float32), "norm3_b": jnp.zeros((1, E), jnp.float32),
    }


# ----------------------------------------------------------------------------
# Main
# ----------------------------------------------------------------------------

if __name__ == "__main__":
    embed_dim = 32
    n_heads = 4
    d_k = 8
    d_v = 8
    batch_size = 2
    seq_len = 8
    d_inner = 64

    root = jax.random.PRNGKey(0)
    kx, kenc, kp = jax.random.split(root, 3)

    x = jax.random.normal(kx, (batch_size, seq_len, embed_dim), jnp.float32)
    encoder_data = jax.random.normal(kenc, (batch_size, seq_len, embed_dim), jnp.float32)

    # decoder mask: causal; encoder mask: all-visible.  Converted to additive f32 bias.
    causal = jnp.tril(jnp.ones((seq_len, seq_len), jnp.bool_))
    decoder_mask = jnp.broadcast_to(causal, (batch_size, seq_len, seq_len))
    encoder_mask = jnp.ones((batch_size, seq_len, seq_len), jnp.bool_)
    decoder_mask_bias = jnp.where(decoder_mask, 0.0, -1e9).astype(jnp.float32)
    encoder_mask_bias = jnp.where(encoder_mask, 0.0, -1e9).astype(jnp.float32)

    params = init_params(kp, embed_dim, n_heads, d_k, d_v, d_inner)

    fwd = jax.jit(functools.partial(decoder_layer, n_heads=n_heads, d_k=d_k, d_v=d_v))
    out = fwd(x, encoder_data, decoder_mask_bias, encoder_mask_bias, params)
    jax.block_until_ready(out)

    ref = decoder_layer_ref(x, encoder_data, decoder_mask_bias, encoder_mask_bias,
                            params, n_heads=n_heads, d_k=d_k, d_v=d_v)

    assert out.shape == (batch_size, seq_len, embed_dim)
    assert jnp.all(jnp.isfinite(out))
    assert jnp.allclose(out, ref, atol=1e-2, rtol=1e-2), float(jnp.max(jnp.abs(out - ref)))
    print("KERNEL_OK")
</pallas_src>

<mosaic_0001>
module attributes {stable_mosaic.version = 11 : i64} {
  func.func @_decoder_layer_kernel(%arg0: memref<16x32xf32, #tpu.memory_space<vmem>>, %arg1: memref<16x32xf32, #tpu.memory_space<vmem>>, %arg2: memref<2x8x8xf32, #tpu.memory_space<vmem>>, %arg3: memref<2x8x8xf32, #tpu.memory_space<vmem>>, %arg4: memref<32x96xbf16, #tpu.memory_space<vmem>>, %arg5: memref<1x96xf32, #tpu.memory_space<vmem>>, %arg6: memref<32x32xf32, #tpu.memory_space<vmem>>, %arg7: memref<1x32xf32, #tpu.memory_space<vmem>>, %arg8: memref<32x32xbf16, #tpu.memory_space<vmem>>, %arg9: memref<1x32xf32, #tpu.memory_space<vmem>>, %arg10: memref<32x64xbf16, #tpu.memory_space<vmem>>, %arg11: memref<1x64xf32, #tpu.memory_space<vmem>>, %arg12: memref<32x32xf32, #tpu.memory_space<vmem>>, %arg13: memref<1x32xf32, #tpu.memory_space<vmem>>, %arg14: memref<32x64xbf16, #tpu.memory_space<vmem>>, %arg15: memref<1x64xf32, #tpu.memory_space<vmem>>, %arg16: memref<64x32xbf16, #tpu.memory_space<vmem>>, %arg17: memref<1x32xf32, #tpu.memory_space<vmem>>, %arg18: memref<1x32xf32, #tpu.memory_space<vmem>>, %arg19: memref<1x32xf32, #tpu.memory_space<vmem>>, %arg20: memref<1x32xf32, #tpu.memory_space<vmem>>, %arg21: memref<1x32xf32, #tpu.memory_space<vmem>>, %arg22: memref<1x32xf32, #tpu.memory_space<vmem>>, %arg23: memref<1x32xf32, #tpu.memory_space<vmem>>, %arg24: memref<16x32xf32, #tpu.memory_space<vmem>>) attributes {dimension_semantics = [], scalar_prefetch = 0 : i64, scratch_operands = 0 : i64, tpu.core_type = #tpu.core_type<tc>} {
    %c0 = arith.constant 0 : index
    %c0_0 = arith.constant 0 : index
    %0 = vector.load %arg0[%c0, %c0_0] : memref<16x32xf32, #tpu.memory_space<vmem>>, vector<16x32xf32>
    %c0_1 = arith.constant 0 : index
    %c0_2 = arith.constant 0 : index
    %1 = vector.load %arg1[%c0_1, %c0_2] : memref<16x32xf32, #tpu.memory_space<vmem>>, vector<16x32xf32>
    %2 = arith.truncf %0 : vector<16x32xf32> to vector<16x32xbf16>
    %c0_3 = arith.constant 0 : index
    %c0_4 = arith.constant 0 : index
    %3 = vector.load %arg4[%c0_3, %c0_4] : memref<32x96xbf16, #tpu.memory_space<vmem>>, vector<32x96xbf16>
    %cst = arith.constant dense<0.000000e+00> : vector<16x96xf32>
    %4 = tpu.matmul %2, %3, %cst {dimension_numbers = #tpu.dot_dimension_numbers<[1], [0], [0], [1], [0, 0, 1, 1], [], []>} : vector<16x32xbf16>, vector<32x96xbf16>, vector<16x96xf32> -> vector<16x96xf32>
    %c0_5 = arith.constant 0 : index
    %c0_6 = arith.constant 0 : index
    %5 = vector.load %arg5[%c0_5, %c0_6] : memref<1x96xf32, #tpu.memory_space<vmem>>, vector<1x96xf32>
    %6 = vector.broadcast %5 : vector<1x96xf32> to vector<16x96xf32>
    %7 = arith.addf %4, %6 : vector<16x96xf32>
    %8 = vector.extract_strided_slice %7 {offsets = [0, 0], sizes = [16, 32], strides = [1, 1]} : vector<16x96xf32> to vector<16x32xf32>
    %9 = vector.extract_strided_slice %7 {offsets = [0, 32], sizes = [16, 32], strides = [1, 1]} : vector<16x96xf32> to vector<16x32xf32>
    %10 = vector.extract_strided_slice %7 {offsets = [0, 64], sizes = [16, 32], strides = [1, 1]} : vector<16x96xf32> to vector<16x32xf32>
    %c0_7 = arith.constant 0 : index
    %c0_8 = arith.constant 0 : index
    %c0_9 = arith.constant 0 : index
    %11 = vector.load %arg2[%c0_7, %c0_8, %c0_9] : memref<2x8x8xf32, #tpu.memory_space<vmem>>, vector<2x8x8xf32>
    %c0_10 = arith.constant 0 : index
    %c0_11 = arith.constant 0 : index
    %12 = vector.load %arg6[%c0_10, %c0_11] : memref<32x32xf32, #tpu.memory_space<vmem>>, vector<32x32xf32>
    %cst_12 = arith.constant 0.000000e+00 : f32
    %13 = vector.broadcast %cst_12 : f32 to vector<16x32xf32>
    %14 = vector.extract_strided_slice %8 {offsets = [0, 0], sizes = [16, 8], strides = [1, 1]} : vector<16x32xf32> to vector<16x8xf32>
    %15 = vector.shape_cast %14 : vector<16x8xf32> to vector<2x8x8xf32>
    %16 = arith.truncf %15 : vector<2x8x8xf32> to vector<2x8x8xbf16>
    %17 = vector.extract_strided_slice %9 {offsets = [0, 0], sizes = [16, 8], strides = [1, 1]} : vector<16x32xf32> to vector<16x8xf32>
    %18 = vector.shape_cast %17 : vector<16x8xf32> to vector<2x8x8xf32>
    %19 = arith.truncf %18 : vector<2x8x8xf32> to vector<2x8x8xbf16>
    %20 = vector.extract_strided_slice %10 {offsets = [0, 0], sizes = [16, 8], strides = [1, 1]} : vector<16x32xf32> to vector<16x8xf32>
    %21 = vector.shape_cast %20 : vector<16x8xf32> to vector<2x8x8xf32>
    %22 = arith.truncf %21 : vector<2x8x8xf32> to vector<2x8x8xbf16>
    "tpu.trace_start"() <{level = 10 : i32, message = "bqd,bkd->bqk"}> : () -> ()
    %cst_13 = arith.constant dense<0.000000e+00> : vector<2x8x8xf32>
    %23 = tpu.matmul %16, %19, %cst_13 {dimension_numbers = #tpu.dot_dimension_numbers<[2], [2], [1], [1], [0, 0, 0, 1, 1, 1], [0], [0]>} : vector<2x8x8xbf16>, vector<2x8x8xbf16>, vector<2x8x8xf32> -> vector<2x8x8xf32>
    "tpu.trace_stop"() : () -> ()
    %cst_14 = arith.constant 0.353553385 : f32
    %24 = vector.broadcast %cst_14 : f32 to vector<2x8x8xf32>
    %25 = arith.mulf %23, %24 : vector<2x8x8xf32>
    %26 = arith.addf %25, %11 : vector<2x8x8xf32>
    %cst_15 = arith.constant dense<0xFF800000> : vector<2x8xf32>
    %27 = vector.multi_reduction <maximumf>, %26, %cst_15 [2] : vector<2x8x8xf32> to vector<2x8xf32>
    %28 = vector.shape_cast %27 : vector<2x8xf32> to vector<2x8x1xf32>
    %29 = vector.broadcast %28 : vector<2x8x1xf32> to vector<2x8x8xf32>
    %30 = arith.subf %26, %29 : vector<2x8x8xf32>
    %31 = math.exp %30 : vector<2x8x8xf32>
    %cst_16 = arith.constant dense<0.000000e+00> : vector<2x8xf32>
    %32 = vector.multi_reduction <add>, %31, %cst_16 [2] : vector<2x8x8xf32> to vector<2x8xf32>
    %33 = vector.shape_cast %32 : vector<2x8xf32> to vector<2x8x1xf32>
    %34 = tpu.reciprocal %33 {approx = true} : vector<2x8x1xf32> -> vector<2x8x1xf32>
    %35 = vector.broadcast %34 : vector<2x8x1xf32> to vector<2x8x8xf32>
    %36 = arith.mulf %31, %35 : vector<2x8x8xf32>
    %37 = arith.truncf %36 : vector<2x8x8xf32> to vector<2x8x8xbf16>
    "tpu.trace_start"() <{level = 10 : i32, message = "bqk,bkd->bqd"}> : () -> ()
    %cst_17 = arith.constant dense<0.000000e+00> : vector<2x8x8xf32>
    %38 = tpu.matmul %37, %22, %cst_17 {dimension_numbers = #tpu.dot_dimension_numbers<[2], [1], [1], [2], [0, 0, 0, 1, 1, 2], [0], [0]>} : vector<2x8x8xbf16>, vector<2x8x8xbf16>, vector<2x8x8xf32> -> vector<2x8x8xf32>
    "tpu.trace_stop"() : () -> ()
    %39 = vector.shape_cast %38 : vector<2x8x8xf32> to vector<16x8xf32>
    %40 = vector.extract_strided_slice %12 {offsets = [0, 0], sizes = [8, 32], strides = [1, 1]} : vector<32x32xf32> to vector<8x32xf32>
    %41 = arith.truncf %40 : vector<8x32xf32> to vector<8x32xbf16>
    %42 = arith.truncf %39 : vector<16x8xf32> to vector<16x8xbf16>
    %cst_18 = arith.constant dense<0.000000e+00> : vector<16x32xf32>
    %43 = tpu.matmul %42, %41, %cst_18 {dimension_numbers = #tpu.dot_dimension_numbers<[1], [0], [0], [1], [0, 0, 1, 1], [], []>} : vector<16x8xbf16>, vector<8x32xbf16>, vector<16x32xf32> -> vector<16x32xf32>
    %44 = arith.addf %13, %43 : vector<16x32xf32>
    %45 = vector.extract_strided_slice %8 {offsets = [0, 8], sizes = [16, 8], strides = [1, 1]} : vector<16x32xf32> to vector<16x8xf32>
    %46 = vector.shape_cast %45 : vector<16x8xf32> to vector<2x8x8xf32>
    %47 = arith.truncf %46 : vector<2x8x8xf32> to vector<2x8x8xbf16>
    %48 = vector.extract_strided_slice %9 {offsets = [0, 8], sizes = [16, 8], strides = [1, 1]} : vector<16x32xf32> to vector<16x8xf32>
    %49 = vector.shape_cast %48 : vector<16x8xf32> to vector<2x8x8xf32>
    %50 = arith.truncf %49 : vector<2x8x8xf32> to vector<2x8x8xbf16>
    %51 = vector.extract_strided_slice %10 {offsets = [0, 8], sizes = [16, 8], strides = [1, 1]} : vector<16x32xf32> to vector<16x8xf32>
    %52 = vector.shape_cast %51 : vector<16x8xf32> to vector<2x8x8xf32>
    %53 = arith.truncf %52 : vector<2x8x8xf32> to vector<2x8x8xbf16>
    "tpu.trace_start"() <{level = 10 : i32, message = "bqd,bkd->bqk"}> : () -> ()
    %cst_19 = arith.constant dense<0.000000e+00> : vector<2x8x8xf32>
    %54 = tpu.matmul %47, %50, %cst_19 {dimension_numbers = #tpu.dot_dimension_numbers<[2], [2], [1], [1], [0, 0, 0, 1, 1, 1], [0], [0]>} : vector<2x8x8xbf16>, vector<2x8x8xbf16>, vector<2x8x8xf32> -> vector<2x8x8xf32>
    "tpu.trace_stop"() : () -> ()
    %cst_20 = arith.constant 0.353553385 : f32
    %55 = vector.broadcast %cst_20 : f32 to vector<2x8x8xf32>
    %56 = arith.mulf %54, %55 : vector<2x8x8xf32>
    %57 = arith.addf %56, %11 : vector<2x8x8xf32>
    %cst_21 = arith.constant dense<0xFF800000> : vector<2x8xf32>
    %58 = vector.multi_reduction <maximumf>, %57, %cst_21 [2] : vector<2x8x8xf32> to vector<2x8xf32>
    %59 = vector.shape_cast %58 : vector<2x8xf32> to vector<2x8x1xf32>
    %60 = vector.broadcast %59 : vector<2x8x1xf32> to vector<2x8x8xf32>
    %61 = arith.subf %57, %60 : vector<2x8x8xf32>
    %62 = math.exp %61 : vector<2x8x8xf32>
    %cst_22 = arith.constant dense<0.000000e+00> : vector<2x8xf32>
    %63 = vector.multi_reduction <add>, %62, %cst_22 [2] : vector<2x8x8xf32> to vector<2x8xf32>
    %64 = vector.shape_cast %63 : vector<2x8xf32> to vector<2x8x1xf32>
    %65 = tpu.reciprocal %64 {approx = true} : vector<2x8x1xf32> -> vector<2x8x1xf32>
    %66 = vector.broadcast %65 : vector<2x8x1xf32> to vector<2x8x8xf32>
    %67 = arith.mulf %62, %66 : vector<2x8x8xf32>
    %68 = arith.truncf %67 : vector<2x8x8xf32> to vector<2x8x8xbf16>
    "tpu.trace_start"() <{level = 10 : i32, message = "bqk,bkd->bqd"}> : () -> ()
    %cst_23 = arith.constant dense<0.000000e+00> : vector<2x8x8xf32>
    %69 = tpu.matmul %68, %53, %cst_23 {dimension_numbers = #tpu.dot_dimension_numbers<[2], [1], [1], [2], [0, 0, 0, 1, 1, 2], [0], [0]>} : vector<2x8x8xbf16>, vector<2x8x8xbf16>, vector<2x8x8xf32> -> vector<2x8x8xf32>
    "tpu.trace_stop"() : () -> ()
    %70 = vector.shape_cast %69 : vector<2x8x8xf32> to vector<16x8xf32>
    %71 = vector.extract_strided_slice %12 {offsets = [8, 0], sizes = [8, 32], strides = [1, 1]} : vector<32x32xf32> to vector<8x32xf32>
    %72 = arith.truncf %71 : vector<8x32xf32> to vector<8x32xbf16>
    %73 = arith.truncf %70 : vector<16x8xf32> to vector<16x8xbf16>
    %cst_24 = arith.constant dense<0.000000e+00> : vector<16x32xf32>
    %74 = tpu.matmul %73, %72, %cst_24 {dimension_numbers = #tpu.dot_dimension_numbers<[1], [0], [0], [1], [0, 0, 1, 1], [], []>} : vector<16x8xbf16>, vector<8x32xbf16>, vector<16x32xf32> -> vector<16x32xf32>
    %75 = arith.addf %44, %74 : vector<16x32xf32>
    %76 = vector.extract_strided_slice %8 {offsets = [0, 16], sizes = [16, 8], strides = [1, 1]} : vector<16x32xf32> to vector<16x8xf32>
    %77 = vector.shape_cast %76 : vector<16x8xf32> to vector<2x8x8xf32>
    %78 = arith.truncf %77 : vector<2x8x8xf32> to vector<2x8x8xbf16>
    %79 = vector.extract_strided_slice %9 {offsets = [0, 16], sizes = [16, 8], strides = [1, 1]} : vector<16x32xf32> to vector<16x8xf32>
    %80 = vector.shape_cast %79 : vector<16x8xf32> to vector<2x8x8xf32>
    %81 = arith.truncf %80 : vector<2x8x8xf32> to vector<2x8x8xbf16>
    %82 = vector.extract_strided_slice %10 {offsets = [0, 16], sizes = [16, 8], strides = [1, 1]} : vector<16x32xf32> to vector<16x8xf32>
    %83 = vector.shape_cast %82 : vector<16x8xf32> to vector<2x8x8xf32>
    %84 = arith.truncf %83 : vector<2x8x8xf32> to vector<2x8x8xbf16>
    "tpu.trace_start"() <{level = 10 : i32, message = "bqd,bkd->bqk"}> : () -> ()
    %cst_25 = arith.constant dense<0.000000e+00> : vector<2x8x8xf32>
    %85 = tpu.matmul %78, %81, %cst_25 {dimension_numbers = #tpu.dot_dimension_numbers<[2], [2], [1], [1], [0, 0, 0, 1, 1, 1], [0], [0]>} : vector<2x8x8xbf16>, vector<2x8x8xbf16>, vector<2x8x8xf32> -> vector<2x8x8xf32>
    "tpu.trace_stop"() : () -> ()
    %cst_26 = arith.constant 0.353553385 : f32
    %86 = vector.broadcast %cst_26 : f32 to vector<2x8x8xf32>
    %87 = arith.mulf %85, %86 : vector<2x8x8xf32>
    %88 = arith.addf %87, %11 : vector<2x8x8xf32>
    %cst_27 = arith.constant dense<0xFF800000> : vector<2x8xf32>
    %89 = vector.multi_reduction <maximumf>, %88, %cst_27 [2] : vector<2x8x8xf32> to vector<2x8xf32>
    %90 = vector.shape_cast %89 : vector<2x8xf32> to vector<2x8x1xf32>
    %91 = vector.broadcast %90 : vector<2x8x1xf32> to vector<2x8x8xf32>
    %92 = arith.subf %88, %91 : vector<2x8x8xf32>
    %93 = math.exp %92 : vector<2x8x8xf32>
    %cst_28 = arith.constant dense<0.000000e+00> : vector<2x8xf32>
    %94 = vector.multi_reduction <add>, %93, %cst_28 [2] : vector<2x8x8xf32> to vector<2x8xf32>
    %95 = vector.shape_cast %94 : vector<2x8xf32> to vector<2x8x1xf32>
    %96 = tpu.reciprocal %95 {approx = true} : vector<2x8x1xf32> -> vector<2x8x1xf32>
    %97 = vector.broadcast %96 : vector<2x8x1xf32> to vector<2x8x8xf32>
    %98 = arith.mulf %93, %97 : vector<2x8x8xf32>
    %99 = arith.truncf %98 : vector<2x8x8xf32> to vector<2x8x8xbf16>
    "tpu.trace_start"() <{level = 10 : i32, message = "bqk,bkd->bqd"}> : () -> ()
    %cst_29 = arith.constant dense<0.000000e+00> : vector<2x8x8xf32>
    %100 = tpu.matmul %99, %84, %cst_29 {dimension_numbers = #tpu.dot_dimension_numbers<[2], [1], [1], [2], [0, 0, 0, 1, 1, 2], [0], [0]>} : vector<2x8x8xbf16>, vector<2x8x8xbf16>, vector<2x8x8xf32> -> vector<2x8x8xf32>
    "tpu.trace_stop"() : () -> ()
    %101 = vector.shape_cast %100 : vector<2x8x8xf32> to vector<16x8xf32>
    %102 = vector.extract_strided_slice %12 {offsets = [16, 0], sizes = [8, 32], strides = [1, 1]} : vector<32x32xf32> to vector<8x32xf32>
    %103 = arith.truncf %102 : vector<8x32xf32> to vector<8x32xbf16>
    %104 = arith.truncf %101 : vector<16x8xf32> to vector<16x8xbf16>
    %cst_30 = arith.constant dense<0.000000e+00> : vector<16x32xf32>
    %105 = tpu.matmul %104, %103, %cst_30 {dimension_numbers = #tpu.dot_dimension_numbers<[1], [0], [0], [1], [0, 0, 1, 1], [], []>} : vector<16x8xbf16>, vector<8x32xbf16>, vector<16x32xf32> -> vector<16x32xf32>
    %106 = arith.addf %75, %105 : vector<16x32xf32>
    %107 = vector.extract_strided_slice %8 {offsets = [0, 24], sizes = [16, 8], strides = [1, 1]} : vector<16x32xf32> to vector<16x8xf32>
    %108 = vector.shape_cast %107 : vector<16x8xf32> to vector<2x8x8xf32>
    %109 = arith.truncf %108 : vector<2x8x8xf32> to vector<2x8x8xbf16>
    %110 = vector.extract_strided_slice %9 {offsets = [0, 24], sizes = [16, 8], strides = [1, 1]} : vector<16x32xf32> to vector<16x8xf32>
    %111 = vector.shape_cast %110 : vector<16x8xf32> to vector<2x8x8xf32>
    %112 = arith.truncf %111 : vector<2x8x8xf32> to vector<2x8x8xbf16>
    %113 = vector.extract_strided_slice %10 {offsets = [0, 24], sizes = [16, 8], strides = [1, 1]} : vector<16x32xf32> to vector<16x8xf32>
    %114 = vector.shape_cast %113 : vector<16x8xf32> to vector<2x8x8xf32>
    %115 = arith.truncf %114 : vector<2x8x8xf32> to vector<2x8x8xbf16>
    "tpu.trace_start"() <{level = 10 : i32, message = "bqd,bkd->bqk"}> : () -> ()
    %cst_31 = arith.constant dense<0.000000e+00> : vector<2x8x8xf32>
    %116 = tpu.matmul %109, %112, %cst_31 {dimension_numbers = #tpu.dot_dimension_numbers<[2], [2], [1], [1], [0, 0, 0, 1, 1, 1], [0], [0]>} : vector<2x8x8xbf16>, vector<2x8x8xbf16>, vector<2x8x8xf32> -> vector<2x8x8xf32>
    "tpu.trace_stop"() : () -> ()
    %cst_32 = arith.constant 0.353553385 : f32
    %117 = vector.broadcast %cst_32 : f32 to vector<2x8x8xf32>
    %118 = arith.mulf %116, %117 : vector<2x8x8xf32>
    %119 = arith.addf %118, %11 : vector<2x8x8xf32>
    %cst_33 = arith.constant dense<0xFF800000> : vector<2x8xf32>
    %120 = vector.multi_reduction <maximumf>, %119, %cst_33 [2] : vector<2x8x8xf32> to vector<2x8xf32>
    %121 = vector.shape_cast %120 : vector<2x8xf32> to vector<2x8x1xf32>
    %122 = vector.broadcast %121 : vector<2x8x1xf32> to vector<2x8x8xf32>
    %123 = arith.subf %119, %122 : vector<2x8x8xf32>
    %124 = math.exp %123 : vector<2x8x8xf32>
    %cst_34 = arith.constant dense<0.000000e+00> : vector<2x8xf32>
    %125 = vector.multi_reduction <add>, %124, %cst_34 [2] : vector<2x8x8xf32> to vector<2x8xf32>
    %126 = vector.shape_cast %125 : vector<2x8xf32> to vector<2x8x1xf32>
    %127 = tpu.reciprocal %126 {approx = true} : vector<2x8x1xf32> -> vector<2x8x1xf32>
    %128 = vector.broadcast %127 : vector<2x8x1xf32> to vector<2x8x8xf32>
    %129 = arith.mulf %124, %128 : vector<2x8x8xf32>
    %130 = arith.truncf %129 : vector<2x8x8xf32> to vector<2x8x8xbf16>
    "tpu.trace_start"() <{level = 10 : i32, message = "bqk,bkd->bqd"}> : () -> ()
    %cst_35 = arith.constant dense<0.000000e+00> : vector<2x8x8xf32>
    %131 = tpu.matmul %130, %115, %cst_35 {dimension_numbers = #tpu.dot_dimension_numbers<[2], [1], [1], [2], [0, 0, 0, 1, 1, 2], [0], [0]>} : vector<2x8x8xbf16>, vector<2x8x8xbf16>, vector<2x8x8xf32> -> vector<2x8x8xf32>
    "tpu.trace_stop"() : () -> ()
    %132 = vector.shape_cast %131 : vector<2x8x8xf32> to vector<16x8xf32>
    %133 = vector.extract_strided_slice %12 {offsets = [24, 0], sizes = [8, 32], strides = [1, 1]} : vector<32x32xf32> to vector<8x32xf32>
    %134 = arith.truncf %133 : vector<8x32xf32> to vector<8x32xbf16>
    %135 = arith.truncf %132 : vector<16x8xf32> to vector<16x8xbf16>
    %cst_36 = arith.constant dense<0.000000e+00> : vector<16x32xf32>
    %136 = tpu.matmul %135, %134, %cst_36 {dimension_numbers = #tpu.dot_dimension_numbers<[1], [0], [0], [1], [0, 0, 1, 1], [], []>} : vector<16x8xbf16>, vector<8x32xbf16>, vector<16x32xf32> -> vector<16x32xf32>
    %137 = arith.addf %106, %136 : vector<16x32xf32>
    %c0_37 = arith.constant 0 : index
    %c0_38 = arith.constant 0 : index
    %138 = vector.load %arg7[%c0_37, %c0_38] : memref<1x32xf32, #tpu.memory_space<vmem>>, vector<1x32xf32>
    %139 = vector.broadcast %138 : vector<1x32xf32> to vector<16x32xf32>
    %140 = arith.addf %137, %139 : vector<16x32xf32>
    %141 = arith.addf %0, %140 : vector<16x32xf32>
    %cst_39 = arith.constant dense<0.000000e+00> : vector<16xf32>
    %142 = vector.multi_reduction <add>, %141, %cst_39 [1] : vector<16x32xf32> to vector<16xf32>
    %143 = vector.shape_cast %142 : vector<16xf32> to vector<16x1xf32>
    %cst_40 = arith.constant 3.200000e+01 : f32
    %144 = vector.broadcast %cst_40 : f32 to vector<16x1xf32>
    %145 = arith.divf %143, %144 : vector<16x1xf32>
    %146 = vector.broadcast %145 : vector<16x1xf32> to vector<16x32xf32>
    %147 = arith.subf %141, %146 : vector<16x32xf32>
    %148 = arith.mulf %147, %147 : vector<16x32xf32>
    %cst_41 = arith.constant dense<0.000000e+00> : vector<16xf32>
    %149 = vector.multi_reduction <add>, %148, %cst_41 [1] : vector<16x32xf32> to vector<16xf32>
    %150 = vector.shape_cast %149 : vector<16xf32> to vector<16x1xf32>
    %cst_42 = arith.constant 3.200000e+01 : f32
    %151 = vector.broadcast %cst_42 : f32 to vector<16x1xf32>
    %152 = arith.divf %150, %151 : vector<16x1xf32>
    %153 = vector.broadcast %145 : vector<16x1xf32> to vector<16x32xf32>
    %154 = arith.subf %141, %153 : vector<16x32xf32>
    %cst_43 = arith.constant 9.99999974E-6 : f32
    %155 = vector.broadcast %cst_43 : f32 to vector<16x1xf32>
    %156 = arith.addf %152, %155 : vector<16x1xf32>
    %157 = math.rsqrt %156 : vector<16x1xf32>
    %158 = vector.broadcast %157 : vector<16x1xf32> to vector<16x32xf32>
    %159 = arith.mulf %154, %158 : vector<16x32xf32>
    %c0_44 = arith.constant 0 : index
    %c0_45 = arith.constant 0 : index
    %160 = vector.load %arg18[%c0_44, %c0_45] : memref<1x32xf32, #tpu.memory_space<vmem>>, vector<1x32xf32>
    %161 = vector.broadcast %160 : vector<1x32xf32> to vector<16x32xf32>
    %162 = arith.mulf %159, %161 : vector<16x32xf32>
    %c0_46 = arith.constant 0 : index
    %c0_47 = arith.constant 0 : index
    %163 = vector.load %arg19[%c0_46, %c0_47] : memref<1x32xf32, #tpu.memory_space<vmem>>, vector<1x32xf32>
    %164 = vector.broadcast %163 : vector<1x32xf32> to vector<16x32xf32>
    %165 = arith.addf %162, %164 : vector<16x32xf32>
    %166 = arith.truncf %165 : vector<16x32xf32> to vector<16x32xbf16>
    %c0_48 = arith.constant 0 : index
    %c0_49 = arith.constant 0 : index
    %167 = vector.load %arg8[%c0_48, %c0_49] : memref<32x32xbf16, #tpu.memory_space<vmem>>, vector<32x32xbf16>
    %cst_50 = arith.constant dense<0.000000e+00> : vector<16x32xf32>
    %168 = tpu.matmul %166, %167, %cst_50 {dimension_numbers = #tpu.dot_dimension_numbers<[1], [0], [0], [1], [0, 0, 1, 1], [], []>} : vector<16x32xbf16>, vector<32x32xbf16>, vector<16x32xf32> -> vector<16x32xf32>
    %c0_51 = arith.constant 0 : index
    %c0_52 = arith.constant 0 : index
    %169 = vector.load %arg9[%c0_51, %c0_52] : memref<1x32xf32, #tpu.memory_space<vmem>>, vector<1x32xf32>
    %170 = vector.broadcast %169 : vector<1x32xf32> to vector<16x32xf32>
    %171 = arith.addf %168, %170 : vector<16x32xf32>
    %172 = arith.truncf %1 : vector<16x32xf32> to vector<16x32xbf16>
    %c0_53 = arith.constant 0 : index
    %c0_54 = arith.constant 0 : index
    %173 = vector.load %arg10[%c0_53, %c0_54] : memref<32x64xbf16, #tpu.memory_space<vmem>>, vector<32x64xbf16>
    %cst_55 = arith.constant dense<0.000000e+00> : vector<16x64xf32>
    %174 = tpu.matmul %172, %173, %cst_55 {dimension_numbers = #tpu.dot_dimension_numbers<[1], [0], [0], [1], [0, 0, 1, 1], [], []>} : vector<16x32xbf16>, vector<32x64xbf16>, vector<16x64xf32> -> vector<16x64xf32>
    %c0_56 = arith.constant 0 : index
    %c0_57 = arith.constant 0 : index
    %175 = vector.load %arg11[%c0_56, %c0_57] : memref<1x64xf32, #tpu.memory_space<vmem>>, vector<1x64xf32>
    %176 = vector.broadcast %175 : vector<1x64xf32> to vector<16x64xf32>
    %177 = arith.addf %174, %176 : vector<16x64xf32>
    %178 = vector.extract_strided_slice %177 {offsets = [0, 0], sizes = [16, 32], strides = [1, 1]} : vector<16x64xf32> to vector<16x32xf32>
    %179 = vector.extract_strided_slice %177 {offsets = [0, 32], sizes = [16, 32], strides = [1, 1]} : vector<16x64xf32> to vector<16x32xf32>
    %c0_58 = arith.constant 0 : index
    %c0_59 = arith.constant 0 : index
    %c0_60 = arith.constant 0 : index
    %180 = vector.load %arg3[%c0_58, %c0_59, %c0_60] : memref<2x8x8xf32, #tpu.memory_space<vmem>>, vector<2x8x8xf32>
    %c0_61 = arith.constant 0 : index
    %c0_62 = arith.constant 0 : index
    %181 = vector.load %arg12[%c0_61, %c0_62] : memref<32x32xf32, #tpu.memory_space<vmem>>, vector<32x32xf32>
    %cst_63 = arith.constant 0.000000e+00 : f32
    %182 = vector.broadcast %cst_63 : f32 to vector<16x32xf32>
    %183 = vector.extract_strided_slice %171 {offsets = [0, 0], sizes = [16, 8], strides = [1, 1]} : vector<16x32xf32> to vector<16x8xf32>
    %184 = vector.shape_cast %183 : vector<16x8xf32> to vector<2x8x8xf32>
    %185 = arith.truncf %184 : vector<2x8x8xf32> to vector<2x8x8xbf16>
    %186 = vector.extract_strided_slice %178 {offsets = [0, 0], sizes = [16, 8], strides = [1, 1]} : vector<16x32xf32> to vector<16x8xf32>
    %187 = vector.shape_cast %186 : vector<16x8xf32> to vector<2x8x8xf32>
    %188 = arith.truncf %187 : vector<2x8x8xf32> to vector<2x8x8xbf16>
    %189 = vector.extract_strided_slice %179 {offsets = [0, 0], sizes = [16, 8], strides = [1, 1]} : vector<16x32xf32> to vector<16x8xf32>
    %190 = vector.shape_cast %189 : vector<16x8xf32> to vector<2x8x8xf32>
    %191 = arith.truncf %190 : vector<2x8x8xf32> to vector<2x8x8xbf16>
    "tpu.trace_start"() <{level = 10 : i32, message = "bqd,bkd->bqk"}> : () -> ()
    %cst_64 = arith.constant dense<0.000000e+00> : vector<2x8x8xf32>
    %192 = tpu.matmul %185, %188, %cst_64 {dimension_numbers = #tpu.dot_dimension_numbers<[2], [2], [1], [1], [0, 0, 0, 1, 1, 1], [0], [0]>} : vector<2x8x8xbf16>, vector<2x8x8xbf16>, vector<2x8x8xf32> -> vector<2x8x8xf32>
    "tpu.trace_stop"() : () -> ()
    %cst_65 = arith.constant 0.353553385 : f32
    %193 = vector.broadcast %cst_65 : f32 to vector<2x8x8xf32>
    %194 = arith.mulf %192, %193 : vector<2x8x8xf32>
    %195 = arith.addf %194, %180 : vector<2x8x8xf32>
    %cst_66 = arith.constant dense<0xFF800000> : vector<2x8xf32>
    %196 = vector.multi_reduction <maximumf>, %195, %cst_66 [2] : vector<2x8x8xf32> to vector<2x8xf32>
    %197 = vector.shape_cast %196 : vector<2x8xf32> to vector<2x8x1xf32>
    %198 = vector.broadcast %197 : vector<2x8x1xf32> to vector<2x8x8xf32>
    %199 = arith.subf %195, %198 : vector<2x8x8xf32>
    %200 = math.exp %199 : vector<2x8x8xf32>
    %cst_67 = arith.constant dense<0.000000e+00> : vector<2x8xf32>
    %201 = vector.multi_reduction <add>, %200, %cst_67 [2] : vector<2x8x8xf32> to vector<2x8xf32>
    %202 = vector.shape_cast %201 : vector<2x8xf32> to vector<2x8x1xf32>
    %203 = tpu.reciprocal %202 {approx = true} : vector<2x8x1xf32> -> vector<2x8x1xf32>
    %204 = vector.broadcast %203 : vector<2x8x1xf32> to vector<2x8x8xf32>
    %205 = arith.mulf %200, %204 : vector<2x8x8xf32>
    %206 = arith.truncf %205 : vector<2x8x8xf32> to vector<2x8x8xbf16>
    "tpu.trace_start"() <{level = 10 : i32, message = "bqk,bkd->bqd"}> : () -> ()
    %cst_68 = arith.constant dense<0.000000e+00> : vector<2x8x8xf32>
    %207 = tpu.matmul %206, %191, %cst_68 {dimension_numbers = #tpu.dot_dimension_numbers<[2], [1], [1], [2], [0, 0, 0, 1, 1, 2], [0], [0]>} : vector<2x8x8xbf16>, vector<2x8x8xbf16>, vector<2x8x8xf32> -> vector<2x8x8xf32>
    "tpu.trace_stop"() : () -> ()
    %208 = vector.shape_cast %207 : vector<2x8x8xf32> to vector<16x8xf32>
    %209 = vector.extract_strided_slice %181 {offsets = [0, 0], sizes = [8, 32], strides = [1, 1]} : vector<32x32xf32> to vector<8x32xf32>
    %210 = arith.truncf %209 : vector<8x32xf32> to vector<8x32xbf16>
    %211 = arith.truncf %208 : vector<16x8xf32> to vector<16x8xbf16>
    %cst_69 = arith.constant dense<0.000000e+00> : vector<16x32xf32>
    %212 = tpu.matmul %211, %210, %cst_69 {dimension_numbers = #tpu.dot_dimension_numbers<[1], [0], [0], [1], [0, 0, 1, 1], [], []>} : vector<16x8xbf16>, vector<8x32xbf16>, vector<16x32xf32> -> vector<16x32xf32>
    %213 = arith.addf %182, %212 : vector<16x32xf32>
    %214 = vector.extract_strided_slice %171 {offsets = [0, 8], sizes = [16, 8], strides = [1, 1]} : vector<16x32xf32> to vector<16x8xf32>
    %215 = vector.shape_cast %214 : vector<16x8xf32> to vector<2x8x8xf32>
    %216 = arith.truncf %215 : vector<2x8x8xf32> to vector<2x8x8xbf16>
    %217 = vector.extract_strided_slice %178 {offsets = [0, 8], sizes = [16, 8], strides = [1, 1]} : vector<16x32xf32> to vector<16x8xf32>
    %218 = vector.shape_cast %217 : vector<16x8xf32> to vector<2x8x8xf32>
    %219 = arith.truncf %218 : vector<2x8x8xf32> to vector<2x8x8xbf16>
    %220 = vector.extract_strided_slice %179 {offsets = [0, 8], sizes = [16, 8], strides = [1, 1]} : vector<16x32xf32> to vector<16x8xf32>
    %221 = vector.shape_cast %220 : vector<16x8xf32> to vector<2x8x8xf32>
    %222 = arith.truncf %221 : vector<2x8x8xf32> to vector<2x8x8xbf16>
    "tpu.trace_start"() <{level = 10 : i32, message = "bqd,bkd->bqk"}> : () -> ()
    %cst_70 = arith.constant dense<0.000000e+00> : vector<2x8x8xf32>
    %223 = tpu.matmul %216, %219, %cst_70 {dimension_numbers = #tpu.dot_dimension_numbers<[2], [2], [1], [1], [0, 0, 0, 1, 1, 1], [0], [0]>} : vector<2x8x8xbf16>, vector<2x8x8xbf16>, vector<2x8x8xf32> -> vector<2x8x8xf32>
    "tpu.trace_stop"() : () -> ()
    %cst_71 = arith.constant 0.353553385 : f32
    %224 = vector.broadcast %cst_71 : f32 to vector<2x8x8xf32>
    %225 = arith.mulf %223, %224 : vector<2x8x8xf32>
    %226 = arith.addf %225, %180 : vector<2x8x8xf32>
    %cst_72 = arith.constant dense<0xFF800000> : vector<2x8xf32>
    %227 = vector.multi_reduction <maximumf>, %226, %cst_72 [2] : vector<2x8x8xf32> to vector<2x8xf32>
    %228 = vector.shape_cast %227 : vector<2x8xf32> to vector<2x8x1xf32>
    %229 = vector.broadcast %228 : vector<2x8x1xf32> to vector<2x8x8xf32>
    %230 = arith.subf %226, %229 : vector<2x8x8xf32>
    %231 = math.exp %230 : vector<2x8x8xf32>
    %cst_73 = arith.constant dense<0.000000e+00> : vector<2x8xf32>
    %232 = vector.multi_reduction <add>, %231, %cst_73 [2] : vector<2x8x8xf32> to vector<2x8xf32>
    %233 = vector.shape_cast %232 : vector<2x8xf32> to vector<2x8x1xf32>
    %234 = tpu.reciprocal %233 {approx = true} : vector<2x8x1xf32> -> vector<2x8x1xf32>
    %235 = vector.broadcast %234 : vector<2x8x1xf32> to vector<2x8x8xf32>
    %236 = arith.mulf %231, %235 : vector<2x8x8xf32>
    %237 = arith.truncf %236 : vector<2x8x8xf32> to vector<2x8x8xbf16>
    "tpu.trace_start"() <{level = 10 : i32, message = "bqk,bkd->bqd"}> : () -> ()
    %cst_74 = arith.constant dense<0.000000e+00> : vector<2x8x8xf32>
    %238 = tpu.matmul %237, %222, %cst_74 {dimension_numbers = #tpu.dot_dimension_numbers<[2], [1], [1], [2], [0, 0, 0, 1, 1, 2], [0], [0]>} : vector<2x8x8xbf16>, vector<2x8x8xbf16>, vector<2x8x8xf32> -> vector<2x8x8xf32>
    "tpu.trace_stop"() : () -> ()
    %239 = vector.shape_cast %238 : vector<2x8x8xf32> to vector<16x8xf32>
    %240 = vector.extract_strided_slice %181 {offsets = [8, 0], sizes = [8, 32], strides = [1, 1]} : vector<32x32xf32> to vector<8x32xf32>
    %241 = arith.truncf %240 : vector<8x32xf32> to vector<8x32xbf16>
    %242 = arith.truncf %239 : vector<16x8xf32> to vector<16x8xbf16>
    %cst_75 = arith.constant dense<0.000000e+00> : vector<16x32xf32>
    %243 = tpu.matmul %242, %241, %cst_75 {dimension_numbers = #tpu.dot_dimension_numbers<[1], [0], [0], [1], [0, 0, 1, 1], [], []>} : vector<16x8xbf16>, vector<8x32xbf16>, vector<16x32xf32> -> vector<16x32xf32>
    %244 = arith.addf %213, %243 : vector<16x32xf32>
    %245 = vector.extract_strided_slice %171 {offsets = [0, 16], sizes = [16, 8], strides = [1, 1]} : vector<16x32xf32> to vector<16x8xf32>
    %246 = vector.shape_cast %245 : vector<16x8xf32> to vector<2x8x8xf32>
    %247 = arith.truncf %246 : vector<2x8x8xf32> to vector<2x8x8xbf16>
    %248 = vector.extract_strided_slice %178 {offsets = [0, 16], sizes = [16, 8], strides = [1, 1]} : vector<16x32xf32> to vector<16x8xf32>
    %249 = vector.shape_cast %248 : vector<16x8xf32> to vector<2x8x8xf32>
    %250 = arith.truncf %249 : vector<2x8x8xf32> to vector<2x8x8xbf16>
    %251 = vector.extract_strided_slice %179 {offsets = [0, 16], sizes = [16, 8], strides = [1, 1]} : vector<16x32xf32> to vector<16x8xf32>
    %252 = vector.shape_cast %251 : vector<16x8xf32> to vector<2x8x8xf32>
    %253 = arith.truncf %252 : vector<2x8x8xf32> to vector<2x8x8xbf16>
    "tpu.trace_start"() <{level = 10 : i32, message = "bqd,bkd->bqk"}> : () -> ()
    %cst_76 = arith.constant dense<0.000000e+00> : vector<2x8x8xf32>
    %254 = tpu.matmul %247, %250, %cst_76 {dimension_numbers = #tpu.dot_dimension_numbers<[2], [2], [1], [1], [0, 0, 0, 1, 1, 1], [0], [0]>} : vector<2x8x8xbf16>, vector<2x8x8xbf16>, vector<2x8x8xf32> -> vector<2x8x8xf32>
    "tpu.trace_stop"() : () -> ()
    %cst_77 = arith.constant 0.353553385 : f32
    %255 = vector.broadcast %cst_77 : f32 to vector<2x8x8xf32>
    %256 = arith.mulf %254, %255 : vector<2x8x8xf32>
    %257 = arith.addf %256, %180 : vector<2x8x8xf32>
    %cst_78 = arith.constant dense<0xFF800000> : vector<2x8xf32>
    %258 = vector.multi_reduction <maximumf>, %257, %cst_78 [2] : vector<2x8x8xf32> to vector<2x8xf32>
    %259 = vector.shape_cast %258 : vector<2x8xf32> to vector<2x8x1xf32>
    %260 = vector.broadcast %259 : vector<2x8x1xf32> to vector<2x8x8xf32>
    %261 = arith.subf %257, %260 : vector<2x8x8xf32>
    %262 = math.exp %261 : vector<2x8x8xf32>
    %cst_79 = arith.constant dense<0.000000e+00> : vector<2x8xf32>
    %263 = vector.multi_reduction <add>, %262, %cst_79 [2] : vector<2x8x8xf32> to vector<2x8xf32>
    %264 = vector.shape_cast %263 : vector<2x8xf32> to vector<2x8x1xf32>
    %265 = tpu.reciprocal %264 {approx = true} : vector<2x8x1xf32> -> vector<2x8x1xf32>
    %266 = vector.broadcast %265 : vector<2x8x1xf32> to vector<2x8x8xf32>
    %267 = arith.mulf %262, %266 : vector<2x8x8xf32>
    %268 = arith.truncf %267 : vector<2x8x8xf32> to vector<2x8x8xbf16>
    "tpu.trace_start"() <{level = 10 : i32, message = "bqk,bkd->bqd"}> : () -> ()
    %cst_80 = arith.constant dense<0.000000e+00> : vector<2x8x8xf32>
    %269 = tpu.matmul %268, %253, %cst_80 {dimension_numbers = #tpu.dot_dimension_numbers<[2], [1], [1], [2], [0, 0, 0, 1, 1, 2], [0], [0]>} : vector<2x8x8xbf16>, vector<2x8x8xbf16>, vector<2x8x8xf32> -> vector<2x8x8xf32>
    "tpu.trace_stop"() : () -> ()
    %270 = vector.shape_cast %269 : vector<2x8x8xf32> to vector<16x8xf32>
    %271 = vector.extract_strided_slice %181 {offsets = [16, 0], sizes = [8, 32], strides = [1, 1]} : vector<32x32xf32> to vector<8x32xf32>
    %272 = arith.truncf %271 : vector<8x32xf32> to vector<8x32xbf16>
    %273 = arith.truncf %270 : vector<16x8xf32> to vector<16x8xbf16>
    %cst_81 = arith.constant dense<0.000000e+00> : vector<16x32xf32>
    %274 = tpu.matmul %273, %272, %cst_81 {dimension_numbers = #tpu.dot_dimension_numbers<[1], [0], [0], [1], [0, 0, 1, 1], [], []>} : vector<16x8xbf16>, vector<8x32xbf16>, vector<16x32xf32> -> vector<16x32xf32>
    %275 = arith.addf %244, %274 : vector<16x32xf32>
    %276 = vector.extract_strided_slice %171 {offsets = [0, 24], sizes = [16, 8], strides = [1, 1]} : vector<16x32xf32> to vector<16x8xf32>
    %277 = vector.shape_cast %276 : vector<16x8xf32> to vector<2x8x8xf32>
    %278 = arith.truncf %277 : vector<2x8x8xf32> to vector<2x8x8xbf16>
    %279 = vector.extract_strided_slice %178 {offsets = [0, 24], sizes = [16, 8], strides = [1, 1]} : vector<16x32xf32> to vector<16x8xf32>
    %280 = vector.shape_cast %279 : vector<16x8xf32> to vector<2x8x8xf32>
    %281 = arith.truncf %280 : vector<2x8x8xf32> to vector<2x8x8xbf16>
    %282 = vector.extract_strided_slice %179 {offsets = [0, 24], sizes = [16, 8], strides = [1, 1]} : vector<16x32xf32> to vector<16x8xf32>
    %283 = vector.shape_cast %282 : vector<16x8xf32> to vector<2x8x8xf32>
    %284 = arith.truncf %283 : vector<2x8x8xf32> to vector<2x8x8xbf16>
    "tpu.trace_start"() <{level = 10 : i32, message = "bqd,bkd->bqk"}> : () -> ()
    %cst_82 = arith.constant dense<0.000000e+00> : vector<2x8x8xf32>
    %285 = tpu.matmul %278, %281, %cst_82 {dimension_numbers = #tpu.dot_dimension_numbers<[2], [2], [1], [1], [0, 0, 0, 1, 1, 1], [0], [0]>} : vector<2x8x8xbf16>, vector<2x8x8xbf16>, vector<2x8x8xf32> -> vector<2x8x8xf32>
    "tpu.trace_stop"() : () -> ()
    %cst_83 = arith.constant 0.353553385 : f32
    %286 = vector.broadcast %cst_83 : f32 to vector<2x8x8xf32>
    %287 = arith.mulf %285, %286 : vector<2x8x8xf32>
    %288 = arith.addf %287, %180 : vector<2x8x8xf32>
    %cst_84 = arith.constant dense<0xFF800000> : vector<2x8xf32>
    %289 = vector.multi_reduction <maximumf>, %288, %cst_84 [2] : vector<2x8x8xf32> to vector<2x8xf32>
    %290 = vector.shape_cast %289 : vector<2x8xf32> to vector<2x8x1xf32>
    %291 = vector.broadcast %290 : vector<2x8x1xf32> to vector<2x8x8xf32>
    %292 = arith.subf %288, %291 : vector<2x8x8xf32>
    %293 = math.exp %292 : vector<2x8x8xf32>
    %cst_85 = arith.constant dense<0.000000e+00> : vector<2x8xf32>
    %294 = vector.multi_reduction <add>, %293, %cst_85 [2] : vector<2x8x8xf32> to vector<2x8xf32>
    %295 = vector.shape_cast %294 : vector<2x8xf32> to vector<2x8x1xf32>
    %296 = tpu.reciprocal %295 {approx = true} : vector<2x8x1xf32> -> vector<2x8x1xf32>
    %297 = vector.broadcast %296 : vector<2x8x1xf32> to vector<2x8x8xf32>
    %298 = arith.mulf %293, %297 : vector<2x8x8xf32>
    %299 = arith.truncf %298 : vector<2x8x8xf32> to vector<2x8x8xbf16>
    "tpu.trace_start"() <{level = 10 : i32, message = "bqk,bkd->bqd"}> : () -> ()
    %cst_86 = arith.constant dense<0.000000e+00> : vector<2x8x8xf32>
    %300 = tpu.matmul %299, %284, %cst_86 {dimension_numbers = #tpu.dot_dimension_numbers<[2], [1], [1], [2], [0, 0, 0, 1, 1, 2], [0], [0]>} : vector<2x8x8xbf16>, vector<2x8x8xbf16>, vector<2x8x8xf32> -> vector<2x8x8xf32>
    "tpu.trace_stop"() : () -> ()
    %301 = vector.shape_cast %300 : vector<2x8x8xf32> to vector<16x8xf32>
    %302 = vector.extract_strided_slice %181 {offsets = [24, 0], sizes = [8, 32], strides = [1, 1]} : vector<32x32xf32> to vector<8x32xf32>
    %303 = arith.truncf %302 : vector<8x32xf32> to vector<8x32xbf16>
    %304 = arith.truncf %301 : vector<16x8xf32> to vector<16x8xbf16>
    %cst_87 = arith.constant dense<0.000000e+00> : vector<16x32xf32>
    %305 = tpu.matmul %304, %303, %cst_87 {dimension_numbers = #tpu.dot_dimension_numbers<[1], [0], [0], [1], [0, 0, 1, 1], [], []>} : vector<16x8xbf16>, vector<8x32xbf16>, vector<16x32xf32> -> vector<16x32xf32>
    %306 = arith.addf %275, %305 : vector<16x32xf32>
    %c0_88 = arith.constant 0 : index
    %c0_89 = arith.constant 0 : index
    %307 = vector.load %arg13[%c0_88, %c0_89] : memref<1x32xf32, #tpu.memory_space<vmem>>, vector<1x32xf32>
    %308 = vector.broadcast %307 : vector<1x32xf32> to vector<16x32xf32>
    %309 = arith.addf %306, %308 : vector<16x32xf32>
    %310 = arith.addf %165, %309 : vector<16x32xf32>
    %cst_90 = arith.constant dense<0.000000e+00> : vector<16xf32>
    %311 = vector.multi_reduction <add>, %310, %cst_90 [1] : vector<16x32xf32> to vector<16xf32>
    %312 = vector.shape_cast %311 : vector<16xf32> to vector<16x1xf32>
    %cst_91 = arith.constant 3.200000e+01 : f32
    %313 = vector.broadcast %cst_91 : f32 to vector<16x1xf32>
    %314 = arith.divf %312, %313 : vector<16x1xf32>
    %315 = vector.broadcast %314 : vector<16x1xf32> to vector<16x32xf32>
    %316 = arith.subf %310, %315 : vector<16x32xf32>
    %317 = arith.mulf %316, %316 : vector<16x32xf32>
    %cst_92 = arith.constant dense<0.000000e+00> : vector<16xf32>
    %318 = vector.multi_reduction <add>, %317, %cst_92 [1] : vector<16x32xf32> to vector<16xf32>
    %319 = vector.shape_cast %318 : vector<16xf32> to vector<16x1xf32>
    %cst_93 = arith.constant 3.200000e+01 : f32
    %320 = vector.broadcast %cst_93 : f32 to vector<16x1xf32>
    %321 = arith.divf %319, %320 : vector<16x1xf32>
    %322 = vector.broadcast %314 : vector<16x1xf32> to vector<16x32xf32>
    %323 = arith.subf %310, %322 : vector<16x32xf32>
    %cst_94 = arith.constant 9.99999974E-6 : f32
    %324 = vector.broadcast %cst_94 : f32 to vector<16x1xf32>
    %325 = arith.addf %321, %324 : vector<16x1xf32>
    %326 = math.rsqrt %325 : vector<16x1xf32>
    %327 = vector.broadcast %326 : vector<16x1xf32> to vector<16x32xf32>
    %328 = arith.mulf %323, %327 : vector<16x32xf32>
    %c0_95 = arith.constant 0 : index
    %c0_96 = arith.constant 0 : index
    %329 = vector.load %arg20[%c0_95, %c0_96] : memref<1x32xf32, #tpu.memory_space<vmem>>, vector<1x32xf32>
    %330 = vector.broadcast %329 : vector<1x32xf32> to vector<16x32xf32>
    %331 = arith.mulf %328, %330 : vector<16x32xf32>
    %c0_97 = arith.constant 0 : index
    %c0_98 = arith.constant 0 : index
    %332 = vector.load %arg21[%c0_97, %c0_98] : memref<1x32xf32, #tpu.memory_space<vmem>>, vector<1x32xf32>
    %333 = vector.broadcast %332 : vector<1x32xf32> to vector<16x32xf32>
    %334 = arith.addf %331, %333 : vector<16x32xf32>
    %335 = arith.truncf %334 : vector<16x32xf32> to vector<16x32xbf16>
    %c0_99 = arith.constant 0 : index
    %c0_100 = arith.constant 0 : index
    %336 = vector.load %arg14[%c0_99, %c0_100] : memref<32x64xbf16, #tpu.memory_space<vmem>>, vector<32x64xbf16>
    %cst_101 = arith.constant dense<0.000000e+00> : vector<16x64xf32>
    %337 = tpu.matmul %335, %336, %cst_101 {dimension_numbers = #tpu.dot_dimension_numbers<[1], [0], [0], [1], [0, 0, 1, 1], [], []>} : vector<16x32xbf16>, vector<32x64xbf16>, vector<16x64xf32> -> vector<16x64xf32>
    %c0_102 = arith.constant 0 : index
    %c0_103 = arith.constant 0 : index
    %338 = vector.load %arg15[%c0_102, %c0_103] : memref<1x64xf32, #tpu.memory_space<vmem>>, vector<1x64xf32>
    %339 = vector.broadcast %338 : vector<1x64xf32> to vector<16x64xf32>
    %340 = arith.addf %337, %339 : vector<16x64xf32>
    %cst_104 = arith.constant 0.000000e+00 : f32
    %341 = vector.broadcast %cst_104 : f32 to vector<16x64xf32>
    %342 = arith.maximumf %340, %341 : vector<16x64xf32>
    %343 = arith.truncf %342 : vector<16x64xf32> to vector<16x64xbf16>
    %c0_105 = arith.constant 0 : index
    %c0_106 = arith.constant 0 : index
    %344 = vector.load %arg16[%c0_105, %c0_106] : memref<64x32xbf16, #tpu.memory_space<vmem>>, vector<64x32xbf16>
    %cst_107 = arith.constant dense<0.000000e+00> : vector<16x32xf32>
    %345 = tpu.matmul %343, %344, %cst_107 {dimension_numbers = #tpu.dot_dimension_numbers<[1], [0], [0], [1], [0, 0, 1, 1], [], []>} : vector<16x64xbf16>, vector<64x32xbf16>, vector<16x32xf32> -> vector<16x32xf32>
    %c0_108 = arith.constant 0 : index
    %c0_109 = arith.constant 0 : index
    %346 = vector.load %arg17[%c0_108, %c0_109] : memref<1x32xf32, #tpu.memory_space<vmem>>, vector<1x32xf32>
    %347 = vector.broadcast %346 : vector<1x32xf32> to vector<16x32xf32>
    %348 = arith.addf %345, %347 : vector<16x32xf32>
    %cst_110 = arith.constant dense<0.000000e+00> : vector<16xf32>
    %349 = vector.multi_reduction <add>, %334, %cst_110 [1] : vector<16x32xf32> to vector<16xf32>
    %350 = vector.shape_cast %349 : vector<16xf32> to vector<16x1xf32>
    %cst_111 = arith.constant 3.200000e+01 : f32
    %351 = vector.broadcast %cst_111 : f32 to vector<16x1xf32>
    %352 = arith.divf %350, %351 : vector<16x1xf32>
    %353 = vector.broadcast %352 : vector<16x1xf32> to vector<16x32xf32>
    %354 = arith.subf %334, %353 : vector<16x32xf32>
    %355 = arith.mulf %354, %354 : vector<16x32xf32>
    %cst_112 = arith.constant dense<0.000000e+00> : vector<16xf32>
    %356 = vector.multi_reduction <add>, %355, %cst_112 [1] : vector<16x32xf32> to vector<16xf32>
    %357 = vector.shape_cast %356 : vector<16xf32> to vector<16x1xf32>
    %cst_113 = arith.constant 3.200000e+01 : f32
    %358 = vector.broadcast %cst_113 : f32 to vector<16x1xf32>
    %359 = arith.divf %357, %358 : vector<16x1xf32>
    %360 = vector.broadcast %352 : vector<16x1xf32> to vector<16x32xf32>
    %361 = arith.subf %334, %360 : vector<16x32xf32>
    %cst_114 = arith.constant 9.99999974E-6 : f32
    %362 = vector.broadcast %cst_114 : f32 to vector<16x1xf32>
    %363 = arith.addf %359, %362 : vector<16x1xf32>
    %364 = math.rsqrt %363 : vector<16x1xf32>
    %365 = vector.broadcast %364 : vector<16x1xf32> to vector<16x32xf32>
    %366 = arith.mulf %361, %365 : vector<16x32xf32>
    %c0_115 = arith.constant 0 : index
    %c0_116 = arith.constant 0 : index
    %367 = vector.load %arg22[%c0_115, %c0_116] : memref<1x32xf32, #tpu.memory_space<vmem>>, vector<1x32xf32>
    %368 = vector.broadcast %367 : vector<1x32xf32> to vector<16x32xf32>
    %369 = arith.mulf %366, %368 : vector<16x32xf32>
    %c0_117 = arith.constant 0 : index
    %c0_118 = arith.constant 0 : index
    %370 = vector.load %arg23[%c0_117, %c0_118] : memref<1x32xf32, #tpu.memory_space<vmem>>, vector<1x32xf32>
    %371 = vector.broadcast %370 : vector<1x32xf32> to vector<16x32xf32>
    %372 = arith.addf %369, %371 : vector<16x32xf32>
    %373 = arith.addf %372, %348 : vector<16x32xf32>
    %c0_119 = arith.constant 0 : index
    %c0_120 = arith.constant 0 : index
    %374 = vector.load %arg24[%c0_119, %c0_120] : memref<16x32xf32, #tpu.memory_space<vmem>>, vector<16x32xf32>
    tpu.vector_store %arg24[%c0_119, %c0_120], %373 {strides = array<i32>} : memref<16x32xf32, #tpu.memory_space<vmem>>, vector<16x32xf32>,
    return
  }
}

</mosaic_0001>

<llo_original>
// kernel: decoder_layer.1
$region0: #{decoder_layer.1}
  #allocation0 [shape = 'u32[]', space=smem, size = 0x4, offset = 0x4, fixed_abs, tag = 'smem constant byte address 0x4 - core index']
  #allocation1 [shape = 'u32[72,128]{1,0:T(1,128)}', space=vmem, size = 0x9000, scoped, tag = 'internal scratch']
  %s0 = inlined_call_operand.hbm [shape: f32[16,32], index: 0, kind: input, shape index: {}]
  %s1 = inlined_call_operand.hbm [shape: f32[16,32], index: 1, kind: input, shape index: {}]
  %s2 = inlined_call_operand.hbm [shape: f32[2,8,8], index: 2, kind: input, shape index: {}]
  %s3 = inlined_call_operand.hbm [shape: f32[2,8,8], index: 3, kind: input, shape index: {}]
  %s4 = inlined_call_operand.hbm [shape: bf16[32,96], index: 4, kind: input, shape index: {}]
  %s5 = inlined_call_operand.hbm [shape: f32[1,96], index: 5, kind: input, shape index: {}]
  %s6 = inlined_call_operand.vmem [shape: f32[32,32], index: 6, kind: input, shape index: {}]
  %s7 = inlined_call_operand.hbm [shape: f32[1,32], index: 7, kind: input, shape index: {}]
  %s8 = inlined_call_operand.hbm [shape: bf16[32,32], index: 8, kind: input, shape index: {}]
  %s9 = inlined_call_operand.hbm [shape: f32[1,32], index: 9, kind: input, shape index: {}]
  %s10 = inlined_call_operand.hbm [shape: bf16[32,64], index: 10, kind: input, shape index: {}]
  %s11 = inlined_call_operand.hbm [shape: f32[1,64], index: 11, kind: input, shape index: {}]
  %s12 = inlined_call_operand.vmem [shape: f32[32,32], index: 12, kind: input, shape index: {}]
  %s13 = inlined_call_operand.hbm [shape: f32[1,32], index: 13, kind: input, shape index: {}]
  %s14 = inlined_call_operand.hbm [shape: bf16[32,64], index: 14, kind: input, shape index: {}]
  %s15 = inlined_call_operand.hbm [shape: f32[1,64], index: 15, kind: input, shape index: {}]
  %s16 = inlined_call_operand.vmem [shape: bf16[64,32], index: 16, kind: input, shape index: {}]
  %s17 = inlined_call_operand.hbm [shape: f32[1,32], index: 17, kind: input, shape index: {}]
  %s18 = inlined_call_operand.hbm [shape: f32[1,32], index: 18, kind: input, shape index: {}]
  %s19 = inlined_call_operand.hbm [shape: f32[1,32], index: 19, kind: input, shape index: {}]
  %s20 = inlined_call_operand.vmem [shape: f32[1,32], index: 20, kind: input, shape index: {}]
  %s21 = inlined_call_operand.hbm [shape: f32[1,32], index: 21, kind: input, shape index: {}]
  %s22 = inlined_call_operand.vmem [shape: f32[1,32], index: 22, kind: input, shape index: {}]
  %s23 = inlined_call_operand.hbm [shape: f32[1,32], index: 23, kind: input, shape index: {}]
  %s24 = inlined_call_operand.hbm [shape: f32[16,32], index: 24, kind: output, shape index: {}]
  %s25 = sld [smem:[#allocation0]]
  $region182: #{decoder_layer.1} parent=0
    _
  %s27 = ssub.s32 1, %s25
  %s28 = scalar_select 0, %s27, %s25
  $region1: #{decoder_layer.1} parent=0
    #allocation2 [shape = 'u8[8192]{0}', space=vmem, size = 0x2000, scoped, tag = 'input window, operand 0, single buffered']
    #allocation3 [shape = 's32[1]{0}', space=sflag, size = 0x4, scoped, tag = 'scoped memory for decoder_layer.1']
    #allocation4 [shape = 's32[1]{0}', space=sflag, size = 0x4, scoped, tag = 'scoped memory for decoder_layer.1']
    #allocation5 [shape = 'u8[8192]{0}', space=vmem, size = 0x2000, scoped, tag = 'input window, operand 1, single buffered']
    #allocation6 [shape = 's32[1]{0}', space=sflag, size = 0x4, scoped, tag = 'scoped memory for decoder_layer.1']
    #allocation7 [shape = 'u8[8192]{0}', space=vmem, size = 0x2000, scoped, tag = 'input window, operand 2, single buffered']
    #allocation8 [shape = 'u8[8192]{0}', space=vmem, size = 0x2000, scoped, tag = 'input window, operand 3, single buffered']
    #allocation9 [shape = 's32[1]{0}', space=sflag, size = 0x4, scoped, tag = 'scoped memory for decoder_layer.1']
    #allocation10 [shape = 'u8[8192]{0}', space=vmem, size = 0x2000, scoped, tag = 'input window, operand 4, single buffered']
    #allocation11 [shape = 'u8[512]{0}', space=vmem, size = 0x400, scoped, tag = 'input window, operand 5, single buffered']
    #allocation12 [shape = 's32[1]{0}', space=sflag, size = 0x4, scoped, tag = 'scoped memory for decoder_layer.1']
    #allocation13 [shape = 'u8[512]{0}', space=vmem, size = 0x400, scoped, tag = 'input window, operand 7, single buffered']
    #allocation14 [shape = 'u8[8192]{0}', space=vmem, size = 0x2000, scoped, tag = 'input window, operand 8, single buffered']
    #allocation15 [shape = 's32[1]{0}', space=sflag, size = 0x4, scoped, tag = 'scoped memory for decoder_layer.1']
    #allocation16 [shape = 'u8[512]{0}', space=vmem, size = 0x400, scoped, tag = 'input window, operand 9, single buffered']
    #allocation17 [shape = 'u8[8192]{0}', space=vmem, size = 0x2000, scoped, tag = 'input window, operand 10, single buffered']
    #allocation18 [shape = 's32[1]{0}', space=sflag, size = 0x4, scoped, tag = 'scoped memory for decoder_layer.1']
    #allocation19 [shape = 'u8[512]{0}', space=vmem, size = 0x400, scoped, tag = 'input window, operand 11, single buffered']
    #allocation20 [shape = 'u8[512]{0}', space=vmem, size = 0x400, scoped, tag = 'input window, operand 13, single buffered']
    #allocation21 [shape = 's32[1]{0}', space=sflag, size = 0x4, scoped, tag = 'scoped memory for decoder_layer.1']
    #allocation22 [shape = 'u8[8192]{0}', space=vmem, size = 0x2000, scoped, tag = 'input window, operand 14, single buffered']
    #allocation23 [shape = 'u8[512]{0}', space=vmem, size = 0x400, scoped, tag = 'input window, operand 15, single buffered']
    #allocation24 [shape = 's32[1]{0}', space=sflag, size = 0x4, scoped, tag = 'scoped memory for decoder_layer.1']
    #allocation25 [shape = 'u8[512]{0}', space=vmem, size = 0x400, scoped, tag = 'input window, operand 17, single buffered']
    #allocation26 [shape = 'u8[512]{0}', space=vmem, size = 0x400, scoped, tag = 'input window, operand 18, single buffered']
    #allocation27 [shape = 's32[1]{0}', space=sflag, size = 0x4, scoped, tag = 'scoped memory for decoder_layer.1']
    #allocation28 [shape = 'u8[512]{0}', space=vmem, size = 0x400, scoped, tag = 'input window, operand 19, single buffered']
    #allocation29 [shape = 'u8[512]{0}', space=vmem, size = 0x400, scoped, tag = 'input window, operand 21, single buffered']
    #allocation30 [shape = 's32[1]{0}', space=sflag, size = 0x4, scoped, tag = 'scoped memory for decoder_layer.1']
    #allocation31 [shape = 'u8[512]{0}', space=vmem, size = 0x400, scoped, tag = 'input window, operand 23, single buffered']
    #allocation32 [shape = 'u8[8192]{0}', space=vmem, size = 0x2000, scoped, tag = 'output window, operand 0, single buffered']
    %29 = vsyncpa [#allocation3], 0
    %30 = vsyncpa [#allocation6], 0
    %31 = vsyncpa [#allocation9], 0
    %32 = vsyncpa [#allocation12], 0
    %33 = vsyncpa [#allocation15], 0
    %34 = vsyncpa [#allocation18], 0
    %35 = vsyncpa [#allocation21], 0
    %36 = vsyncpa [#allocation24], 0
    %37 = vsyncpa [#allocation27], 0
    %38 = vsyncpa [#allocation30], 0
    %39 = vsyncpa [#allocation4], 0
    // Predicated region
    $region2: #{decoder_layer.1} parent=1 // pred_check
      _
    $region3: #{decoder_layer.1} parent=1 // pred_check_branch
      %41 = sbr.rel (0) target = $region5
    $region4: #{decoder_layer.1} parent=1 // pred_region
      %43 = vsyncadd [#allocation3], 0
      %s44 = sshll.u32 %s0, 4
      %s45 = int_to_ptr.hbm [resolvable:$true] %s44
      %s46 = sshll.u32 [#allocation2], 4
      %s47 = int_to_ptr.vmem [resolvable:$true] %s46
      %52 = dma.hbm_to_vmem [thread:$0]  %s45, 256, %s47, [#allocation3], 128, 128, 8
    $region5: #{decoder_layer.1} parent=1 // pred_fallthru
      _
    // Predicated region
    $region6: #{decoder_layer.1} parent=1 // pred_check
      _
    $region7: #{decoder_layer.1} parent=1 // pred_check_branch
      %54 = sbr.rel (0) target = $region9
    $region8: #{decoder_layer.1} parent=1 // pred_region
      %56 = vsyncadd [#allocation6], 0
      %s57 = sshll.u32 %s1, 4
      %s58 = int_to_ptr.hbm [resolvable:$true] %s57
      %s59 = sshll.u32 [#allocation5], 4
      %s60 = int_to_ptr.vmem [resolvable:$true] %s59
      %65 = dma.hbm_to_vmem [thread:$0]  %s58, 256, %s60, [#allocation6], 128, 128, 8
    $region9: #{decoder_layer.1} parent=1 // pred_fallthru
      _
    // Predicated region
    $region10: #{decoder_layer.1} parent=1 // pred_check
      _
    $region11: #{decoder_layer.1} parent=1 // pred_check_branch
      %67 = sbr.rel (0) target = $region13
    $region12: #{decoder_layer.1} parent=1 // pred_region
      %69 = vsyncadd [#allocation6], 0
      %s70 = sshll.u32 %s2, 4
      %s71 = int_to_ptr.hbm [resolvable:$true] %s70
      %s72 = sshll.u32 [#allocation7], 4
      %s73 = int_to_ptr.vmem [resolvable:$true] %s72
      %78 = dma.hbm_to_vmem [thread:$0]  %s71, 256, %s73, [#allocation6], 128, 128, 8
    $region13: #{decoder_layer.1} parent=1 // pred_fallthru
      _
    // Predicated region
    $region14: #{decoder_layer.1} parent=1 // pred_check
      _
    $region15: #{decoder_layer.1} parent=1 // pred_check_branch
      %80 = sbr.rel (0) target = $region17
    $region16: #{decoder_layer.1} parent=1 // pred_region
      %82 = vsyncadd [#allocation9], 0
      %s83 = sshll.u32 %s3, 4
      %s84 = int_to_ptr.hbm [resolvable:$true] %s83
      %s85 = sshll.u32 [#allocation8], 4
      %s86 = int_to_ptr.vmem [resolvable:$true] %s85
      %91 = dma.hbm_to_vmem [thread:$0]  %s84, 256, %s86, [#allocation9], 128, 128, 8
    $region17: #{decoder_layer.1} parent=1 // pred_fallthru
      _
    // Predicated region
    $region18: #{decoder_layer.1} parent=1 // pred_check
      _
    $region19: #{decoder_layer.1} parent=1 // pred_check_branch
      %93 = sbr.rel (0) target = $region21
    $region20: #{decoder_layer.1} parent=1 // pred_region
      %95 = vsyncadd [#allocation9], 0
      %s96 = sshll.u32 %s4, 4
      %s97 = int_to_ptr.hbm [resolvable:$true] %s96
      %s98 = sshll.u32 [#allocation10], 4
      %s99 = int_to_ptr.vmem [resolvable:$true] %s98
      %104 = dma.hbm_to_vmem [thread:$0]  %s97, 256, %s99, [#allocation9], 64, 64, 4
    $region21: #{decoder_layer.1} parent=1 // pred_fallthru
      _
    // Predicated region
    $region22: #{decoder_layer.1} parent=1 // pred_check
      _
    $region23: #{decoder_layer.1} parent=1 // pred_check_branch
      %106 = sbr.rel (0) target = $region25
    $region24: #{decoder_layer.1} parent=1 // pred_region
      %108 = vsyncadd [#allocation12], 0
      %s110 = sshll.u32 %s5, 4
      %s111 = int_to_ptr.hbm [resolvable:$true] %s110
      %s112 = sshll.u32 [#allocation11], 4
      %s113 = int_to_ptr.vmem [resolvable:$true] %s112
      %115 = dma.hbm_to_vmem [thread:$0]  %s111, 16, %s113, [#allocation12]
    $region25: #{decoder_layer.1} parent=1 // pred_fallthru
      _
    // Predicated region
    $region26: #{decoder_layer.1} parent=1 // pred_check
      _
    $region27: #{decoder_layer.1} parent=1 // pred_check_branch
      %117 = sbr.rel (0) target = $region29
    $region28: #{decoder_layer.1} parent=1 // pred_region
      _
    $region29: #{decoder_layer.1} parent=1 // pred_fallthru
      _
    // Predicated region
    $region30: #{decoder_layer.1} parent=1 // pred_check
      _
    $region31: #{decoder_layer.1} parent=1 // pred_check_branch
      %119 = sbr.rel (0) target = $region33
    $region32: #{decoder_layer.1} parent=1 // pred_region
      %121 = vsyncadd [#allocation12], 0
      %s123 = sshll.u32 %s7, 4
      %s124 = int_to_ptr.hbm [resolvable:$true] %s123
      %s125 = sshll.u32 [#allocation13], 4
      %s126 = int_to_ptr.vmem [resolvable:$true] %s125
      %128 = dma.hbm_to_vmem [thread:$0]  %s124, 16, %s126, [#allocation12]
    $region33: #{decoder_layer.1} parent=1 // pred_fallthru
      _
    // Predicated region
    $region34: #{decoder_layer.1} parent=1 // pred_check
      _
    $region35: #{decoder_layer.1} parent=1 // pred_check_branch
      %130 = sbr.rel (0) target = $region37
    $region36: #{decoder_layer.1} parent=1 // pred_region
      %132 = vsyncadd [#allocation15], 0
      %s133 = sshll.u32 %s8, 4
      %s134 = int_to_ptr.hbm [resolvable:$true] %s133
      %s135 = sshll.u32 [#allocation14], 4
      %s136 = int_to_ptr.vmem [resolvable:$true] %s135
      %141 = dma.hbm_to_vmem [thread:$0]  %s134, 256, %s136, [#allocation15], 64, 64, 4
    $region37: #{decoder_layer.1} parent=1 // pred_fallthru
      _
    // Predicated region
    $region38: #{decoder_layer.1} parent=1 // pred_check
      _
    $region39: #{decoder_layer.1} parent=1 // pred_check_branch
      %143 = sbr.rel (0) target = $region41
    $region40: #{decoder_layer.1} parent=1 // pred_region
      %145 = vsyncadd [#allocation15], 0
      %s147 = sshll.u32 %s9, 4
      %s148 = int_to_ptr.hbm [resolvable:$true] %s147
      %s149 = sshll.u32 [#allocation16], 4
      %s150 = int_to_ptr.vmem [resolvable:$true] %s149
      %152 = dma.hbm_to_vmem [thread:$0]  %s148, 16, %s150, [#allocation15]
    $region41: #{decoder_layer.1} parent=1 // pred_fallthru
      _
    // Predicated region
    $region42: #{decoder_layer.1} parent=1 // pred_check
      _
    $region43: #{decoder_layer.1} parent=1 // pred_check_branch
      %154 = sbr.rel (0) target = $region45
    $region44: #{decoder_layer.1} parent=1 // pred_region
      %156 = vsyncadd [#allocation18], 0
      %s157 = sshll.u32 %s10, 4
      %s158 = int_to_ptr.hbm [resolvable:$true] %s157
      %s159 = sshll.u32 [#allocation17], 4
      %s160 = int_to_ptr.vmem [resolvable:$true] %s159
      %165 = dma.hbm_to_vmem [thread:$0]  %s158, 256, %s160, [#allocation18], 64, 64, 4
    $region45: #{decoder_layer.1} parent=1 // pred_fallthru
      _
    // Predicated region
    $region46: #{decoder_layer.1} parent=1 // pred_check
      _
    $region47: #{decoder_layer.1} parent=1 // pred_check_branch
      %167 = sbr.rel (0) target = $region49
    $region48: #{decoder_layer.1} parent=1 // pred_region
      %169 = vsyncadd [#allocation18], 0
      %s171 = sshll.u32 %s11, 4
      %s172 = int_to_ptr.hbm [resolvable:$true] %s171
      %s173 = sshll.u32 [#allocation19], 4
      %s174 = int_to_ptr.vmem [resolvable:$true] %s173
      %176 = dma.hbm_to_vmem [thread:$0]  %s172, 16, %s174, [#allocation18]
    $region49: #{decoder_layer.1} parent=1 // pred_fallthru
      _
    // Predicated region
    $region50: #{decoder_layer.1} parent=1 // pred_check
      _
    $region51: #{decoder_layer.1} parent=1 // pred_check_branch
      %178 = sbr.rel (0) target = $region53
    $region52: #{decoder_layer.1} parent=1 // pred_region
      _
    $region53: #{decoder_layer.1} parent=1 // pred_fallthru
      _
    // Predicated region
    $region54: #{decoder_layer.1} parent=1 // pred_check
      _
    $region55: #{decoder_layer.1} parent=1 // pred_check_branch
      %180 = sbr.rel (0) target = $region57
    $region56: #{decoder_layer.1} parent=1 // pred_region
      %182 = vsyncadd [#allocation21], 0
      %s184 = sshll.u32 %s13, 4
      %s185 = int_to_ptr.hbm [resolvable:$true] %s184
      %s186 = sshll.u32 [#allocation20], 4
      %s187 = int_to_ptr.vmem [resolvable:$true] %s186
      %189 = dma.hbm_to_vmem [thread:$0]  %s185, 16, %s187, [#allocation21]
    $region57: #{decoder_layer.1} parent=1 // pred_fallthru
      _
    // Predicated region
    $region58: #{decoder_layer.1} parent=1 // pred_check
      _
    $region59: #{decoder_layer.1} parent=1 // pred_check_branch
      %191 = sbr.rel (0) target = $region61
    $region60: #{decoder_layer.1} parent=1 // pred_region
      %193 = vsyncadd [#allocation21], 0
      %s194 = sshll.u32 %s14, 4
      %s195 = int_to_ptr.hbm [resolvable:$true] %s194
      %s196 = sshll.u32 [#allocation22], 4
      %s197 = int_to_ptr.vmem [resolvable:$true] %s196
      %202 = dma.hbm_to_vmem [thread:$0]  %s195, 256, %s197, [#allocation21], 64, 64, 4
    $region61: #{decoder_layer.1} parent=1 // pred_fallthru
      _
    // Predicated region
    $region62: #{decoder_layer.1} parent=1 // pred_check
      _
    $region63: #{decoder_layer.1} parent=1 // pred_check_branch
      %204 = sbr.rel (0) target = $region65
    $region64: #{decoder_layer.1} parent=1 // pred_region
      %206 = vsyncadd [#allocation24], 0
      %s208 = sshll.u32 %s15, 4
      %s209 = int_to_ptr.hbm [resolvable:$true] %s208
      %s210 = sshll.u32 [#allocation23], 4
      %s211 = int_to_ptr.vmem [resolvable:$true] %s210
      %213 = dma.hbm_to_vmem [thread:$0]  %s209, 16, %s211, [#allocation24]
    $region65: #{decoder_layer.1} parent=1 // pred_fallthru
      _
    // Predicated region
    $region66: #{decoder_layer.1} parent=1 // pred_check
      _
    $region67: #{decoder_layer.1} parent=1 // pred_check_branch
      %215 = sbr.rel (0) target = $region69
    $region68: #{decoder_layer.1} parent=1 // pred_region
      _
    $region69: #{decoder_layer.1} parent=1 // pred_fallthru
      _
    // Predicated region
    $region70: #{decoder_layer.1} parent=1 // pred_check
      _
    $region71: #{decoder_layer.1} parent=1 // pred_check_branch
      %217 = sbr.rel (0) target = $region73
    $region72: #{decoder_layer.1} parent=1 // pred_region
      %219 = vsyncadd [#allocation24], 0
      %s221 = sshll.u32 %s17, 4
      %s222 = int_to_ptr.hbm [resolvable:$true] %s221
      %s223 = sshll.u32 [#allocation25], 4
      %s224 = int_to_ptr.vmem [resolvable:$true] %s223
      %226 = dma.hbm_to_vmem [thread:$0]  %s222, 16, %s224, [#allocation24]
    $region73: #{decoder_layer.1} parent=1 // pred_fallthru
      _
    // Predicated region
    $region74: #{decoder_layer.1} parent=1 // pred_check
      _
    $region75: #{decoder_layer.1} parent=1 // pred_check_branch
      %228 = sbr.rel (0) target = $region77
    $region76: #{decoder_layer.1} parent=1 // pred_region
      %230 = vsyncadd [#allocation27], 0
      %s232 = sshll.u32 %s18, 4
      %s233 = int_to_ptr.hbm [resolvable:$true] %s232
      %s234 = sshll.u32 [#allocation26], 4
      %s235 = int_to_ptr.vmem [resolvable:$true] %s234
      %237 = dma.hbm_to_vmem [thread:$0]  %s233, 16, %s235, [#allocation27]
    $region77: #{decoder_layer.1} parent=1 // pred_fallthru
      _
    // Predicated region
    $region78: #{decoder_layer.1} parent=1 // pred_check
      _
    $region79: #{decoder_layer.1} parent=1 // pred_check_branch
      %239 = sbr.rel (0) target = $region81
    $region80: #{decoder_layer.1} parent=1 // pred_region
      %241 = vsyncadd [#allocation27], 0
      %s243 = sshll.u32 %s19, 4
      %s244 = int_to_ptr.hbm [resolvable:$true] %s243
      %s245 = sshll.u32 [#allocation28], 4
      %s246 = int_to_ptr.vmem [resolvable:$true] %s245
      %248 = dma.hbm_to_vmem [thread:$0]  %s244, 16, %s246, [#allocation27]
    $region81: #{decoder_layer.1} parent=1 // pred_fallthru
      _
    // Predicated region
    $region82: #{decoder_layer.1} parent=1 // pred_check
      _
    $region83: #{decoder_layer.1} parent=1 // pred_check_branch
      %250 = sbr.rel (0) target = $region85
    $region84: #{decoder_layer.1} parent=1 // pred_region
      _
    $region85: #{decoder_layer.1} parent=1 // pred_fallthru
      _
    // Predicated region
    $region86: #{decoder_layer.1} parent=1 // pred_check
      _
    $region87: #{decoder_layer.1} parent=1 // pred_check_branch
      %252 = sbr.rel (0) target = $region89
    $region88: #{decoder_layer.1} parent=1 // pred_region
      %254 = vsyncadd [#allocation30], 0
      %s256 = sshll.u32 %s21, 4
      %s257 = int_to_ptr.hbm [resolvable:$true] %s256
      %s258 = sshll.u32 [#allocation29], 4
      %s259 = int_to_ptr.vmem [resolvable:$true] %s258
      %261 = dma.hbm_to_vmem [thread:$0]  %s257, 16, %s259, [#allocation30]
    $region89: #{decoder_layer.1} parent=1 // pred_fallthru
      _
    // Predicated region
    $region90: #{decoder_layer.1} parent=1 // pred_check
      _
    $region91: #{decoder_layer.1} parent=1 // pred_check_branch
      %263 = sbr.rel (0) target = $region93
    $region92: #{decoder_layer.1} parent=1 // pred_region
      _
    $region93: #{decoder_layer.1} parent=1 // pred_fallthru
      _
    // Predicated region
    $region94: #{decoder_layer.1} parent=1 // pred_check
      _
    $region95: #{decoder_layer.1} parent=1 // pred_check_branch
      %265 = sbr.rel (0) target = $region97
    $region96: #{decoder_layer.1} parent=1 // pred_region
      %267 = vsyncadd [#allocation30], 0
      %s269 = sshll.u32 %s23, 4
      %s270 = int_to_ptr.hbm [resolvable:$true] %s269
      %s271 = sshll.u32 [#allocation31], 4
      %s272 = int_to_ptr.vmem [resolvable:$true] %s271
      %274 = dma.hbm_to_vmem [thread:$0]  %s270, 16, %s272, [#allocation30]
    $region97: #{decoder_layer.1} parent=1 // pred_fallthru
      _
    // Predicated region
    $region98: #{decoder_layer.1} parent=1 // pred_check
      _
    $region99: #{decoder_layer.1} parent=1 // pred_check_branch
      %276 = sbr.rel (0) target = $region101
    $region100: #{decoder_layer.1} parent=1 // pred_region
      %278 = dma.done [#allocation3], 256
    $region101: #{decoder_layer.1} parent=1 // pred_fallthru
      _
    // Predicated region
    $region102: #{decoder_layer.1} parent=1 // pred_check
      _
    $region103: #{decoder_layer.1} parent=1 // pred_check_branch
      %280 = sbr.rel (0) target = $region105
    $region104: #{decoder_layer.1} parent=1 // pred_region
      %282 = dma.done [#allocation6], 256
    $region105: #{decoder_layer.1} parent=1 // pred_fallthru
      _
    // Predicated region
    $region106: #{decoder_layer.1} parent=1 // pred_check
      _
    $region107: #{decoder_layer.1} parent=1 // pred_check_branch
      %284 = sbr.rel (0) target = $region109
    $region108: #{decoder_layer.1} parent=1 // pred_region
      %286 = dma.done [#allocation6], 256
    $region109: #{decoder_layer.1} parent=1 // pred_fallthru
      _
    // Predicated region
    $region110: #{decoder_layer.1} parent=1 // pred_check
      _
    $region111: #{decoder_layer.1} parent=1 // pred_check_branch
      %288 = sbr.rel (0) target = $region113
    $region112: #{decoder_layer.1} parent=1 // pred_region
      %290 = dma.done [#allocation9], 256
    $region113: #{decoder_layer.1} parent=1 // pred_fallthru
      _
    // Predicated region
    $region114: #{decoder_layer.1} parent=1 // pred_check
      _
    $region115: #{decoder_layer.1} parent=1 // pred_check_branch
      %292 = sbr.rel (0) target = $region117
    $region116: #{decoder_layer.1} parent=1 // pred_region
      %294 = dma.done [#allocation9], 256
    $region117: #{decoder_layer.1} parent=1 // pred_fallthru
      _
    // Predicated region
    $region118: #{decoder_layer.1} parent=1 // pred_check
      _
    $region119: #{decoder_layer.1} parent=1 // pred_check_branch
      %296 = sbr.rel (0) target = $region121
    $region120: #{decoder_layer.1} parent=1 // pred_region
      %298 = dma.done [#allocation12], 16
    $region121: #{decoder_layer.1} parent=1 // pred_fallthru
      _
    // Predicated region
    $region122: #{decoder_layer.1} parent=1 // pred_check
      _
    $region123: #{decoder_layer.1} parent=1 // pred_check_branch
      %300 = sbr.rel (0) target = $region125
    $region124: #{decoder_layer.1} parent=1 // pred_region
      %302 = dma.done [#allocation12], 16
    $region125: #{decoder_layer.1} parent=1 // pred_fallthru
      _
    // Predicated region
    $region126: #{decoder_layer.1} parent=1 // pred_check
      _
    $region127: #{decoder_layer.1} parent=1 // pred_check_branch
      %304 = sbr.rel (0) target = $region129
    $region128: #{decoder_layer.1} parent=1 // pred_region
      %306 = dma.done [#allocation15], 256
    $region129: #{decoder_layer.1} parent=1 // pred_fallthru
      _
    // Predicated region
    $region130: #{decoder_layer.1} parent=1 // pred_check
      _
    $region131: #{decoder_layer.1} parent=1 // pred_check_branch
      %308 = sbr.rel (0) target = $region133
    $region132: #{decoder_layer.1} parent=1 // pred_region
      %310 = dma.done [#allocation15], 16
    $region133: #{decoder_layer.1} parent=1 // pred_fallthru
      _
    // Predicated region
    $region134: #{decoder_layer.1} parent=1 // pred_check
      _
    $region135: #{decoder_layer.1} parent=1 // pred_check_branch
      %312 = sbr.rel (0) target = $region137
    $region136: #{decoder_layer.1} parent=1 // pred_region
      %314 = dma.done [#allocation18], 256
    $region137: #{decoder_layer.1} parent=1 // pred_fallthru
      _
    // Predicated region
    $region138: #{decoder_layer.1} parent=1 // pred_check
      _
    $region139: #{decoder_layer.1} parent=1 // pred_check_branch
      %316 = sbr.rel (0) target = $region141
    $region140: #{decoder_layer.1} parent=1 // pred_region
      %318 = dma.done [#allocation18], 16
    $region141: #{decoder_layer.1} parent=1 // pred_fallthru
      _
    // Predicated region
    $region142: #{decoder_layer.1} parent=1 // pred_check
      _
    $region143: #{decoder_layer.1} parent=1 // pred_check_branch
      %320 = sbr.rel (0) target = $region145
    $region144: #{decoder_layer.1} parent=1 // pred_region
      %322 = dma.done [#allocation21], 16
    $region145: #{decoder_layer.1} parent=1 // pred_fallthru
      _
    // Predicated region
    $region146: #{decoder_layer.1} parent=1 // pred_check
      _
    $region147: #{decoder_layer.1} parent=1 // pred_check_branch
      %324 = sbr.rel (0) target = $region149
    $region148: #{decoder_layer.1} parent=1 // pred_region
      %326 = dma.done [#allocation21], 256
    $region149: #{decoder_layer.1} parent=1 // pred_fallthru
      _
    // Predicated region
    $region150: #{decoder_layer.1} parent=1 // pred_check
      _
    $region151: #{decoder_layer.1} parent=1 // pred_check_branch
      %328 = sbr.rel (0) target = $region153
    $region152: #{decoder_layer.1} parent=1 // pred_region
      %330 = dma.done [#allocation24], 16
    $region153: #{decoder_layer.1} parent=1 // pred_fallthru
      _
    // Predicated region
    $region154: #{decoder_layer.1} parent=1 // pred_check
      _
    $region155: #{decoder_layer.1} parent=1 // pred_check_branch
      %332 = sbr.rel (0) target = $region157
    $region156: #{decoder_layer.1} parent=1 // pred_region
      %334 = dma.done [#allocation24], 16
    $region157: #{decoder_layer.1} parent=1 // pred_fallthru
      _
    // Predicated region
    $region158: #{decoder_layer.1} parent=1 // pred_check
      _
    $region159: #{decoder_layer.1} parent=1 // pred_check_branch
      %336 = sbr.rel (0) target = $region161
    $region160: #{decoder_layer.1} parent=1 // pred_region
      %338 = dma.done [#allocation27], 16
    $region161: #{decoder_layer.1} parent=1 // pred_fallthru
      _
    // Predicated region
    $region162: #{decoder_layer.1} parent=1 // pred_check
      _
    $region163: #{decoder_layer.1} parent=1 // pred_check_branch
      %340 = sbr.rel (0) target = $region165
    $region164: #{decoder_layer.1} parent=1 // pred_region
      %342 = dma.done [#allocation27], 16
    $region165: #{decoder_layer.1} parent=1 // pred_fallthru
      _
    // Predicated region
    $region166: #{decoder_layer.1} parent=1 // pred_check
      _
    $region167: #{decoder_layer.1} parent=1 // pred_check_branch
      %344 = sbr.rel (0) target = $region169
    $region168: #{decoder_layer.1} parent=1 // pred_region
      %346 = dma.done [#allocation30], 16
    $region169: #{decoder_layer.1} parent=1 // pred_fallthru
      _
    // Predicated region
    $region170: #{decoder_layer.1} parent=1 // pred_check
      _
    $region171: #{decoder_layer.1} parent=1 // pred_check_branch
      %348 = sbr.rel (0) target = $region173
    $region172: #{decoder_layer.1} parent=1 // pred_region
      %350 = dma.done [#allocation30], 16
    $region173: #{decoder_layer.1} parent=1 // pred_fallthru
      _
    %v352 = vld [vmem:[#allocation2] sm:$0xff]
    %v353 = vld [vmem:[#allocation2 + $0x8] sm:$0xff]
    %v354 = vld [vmem:[#allocation5] sm:$0xff]
    %v355 = vld [vmem:[#allocation5 + $0x8] sm:$0xff]
    %v356 = vpack.c.bf16 %v353, %v352
    %v357 = vld [vmem:[#allocation10] sm:$0xf]
    %v358 = vld [vmem:[#allocation10 + $0x4] sm:$0xf]
    %v359 = vld [vmem:[#allocation10 + $0x8] sm:$0xf]
    %v360 = vld [vmem:[#allocation10 + $0xc] sm:$0xf]
    %v361 = vld [vmem:[#allocation11] sm:$0x1]
    %v363 = vperm.slane %v361, 0
    %v369 = vunpack.c.l.b16 %v357
    %v370 = vunpack.c.l.b16 %v358
    %v371 = vunpack.c.l.b16 %v359
    %v372 = vunpack.c.l.b16 %v360
    %v373 = vpack.c.b16 %v370, %v369
    %v374 = vpack.c.b16 %v372, %v371
    %vm377 = vcmask 261120
    %v379 = vsel %vm377, %v356, 0
    %381 = vmatpush.bf16.msra.mxu0 0
    %382 = vmatpush.bf16.msra.mxu0 0
    %383 = vmatpush.bf16.msra.mxu0 0
    %384 = vmatpush.bf16.msra.mxu0 0
    %385 = vmatpush.bf16.msra.mxu0 0
    %386 = vmatpush.bf16.msra.mxu0 0
    %387 = vmatpush.bf16.msra.mxu0 %v374
    %388 = vmatpush.bf16.msra.mxu0 %v373
    %389 = vmatmul.bf16.gmra.mxu0 %v379
    %v390 = vpop.f32.mrf.mxu0
    %v391 = vadd.f32 %v363, %v390
    %v392 = vpop.f32.mrf.mxu0
    %v393 = vadd.f32 %v363, %v392
    %394 = vdwg.mxu0
    %v395 = vld [vmem:[#allocation7] sm:$0xff]
    %v396 = vld [vmem:[#allocation7 + $0x8] sm:$0xff]
    %v397 = vld [vmem:[%s6] sm:$0xff]
    %v398 = vld [vmem:[%s6 + $0x8] sm:$0xff]
    %v399 = vld [vmem:[%s6 + $0x10] sm:$0xff]
    %v400 = vld [vmem:[%s6 + $0x18] sm:$0xff]
    %v401 = vpack.c.bf16 %v391, %v391
    %v402 = vpack.c.bf16 %v393, %v393
    %v404 = vunpack.c.l.b16 %v401
    %v405 = vpack.c.b16 %v404, %v404
    %406 = vrot.lane.b32.xlu0 %v405, 96
    %v407 = vpop.permute.xlu0 %406
    %vm408 = vcmask 64512
    %v410 = vsel %vm408, %v401, 0
    %v413 = vsel %vm408, %v407, 0
    %415 = vmatpush.bf16.xpose.msra.mxu0 0
    %416 = vmatpush.bf16.xpose.msra.mxu0 0
    %417 = vmatpush.bf16.xpose.msra.mxu0 0
    %418 = vmatpush.bf16.xpose.msra.mxu0 0
    %419 = vmatpush.bf16.xpose.msra.mxu0 0
    %420 = vmatpush.bf16.xpose.msra.mxu0 0
    %421 = vmatpush.bf16.xpose.msra.mxu0 0
    %422 = vmatpush.bf16.xpose.msra.mxu0 %v413
    %423 = vmatmul.bf16.gmra.mxu0 %v410
    %v424 = vpop.f32.mrf.mxu0
    %v425 = vadd.f32 0.0, %v424
    %v426 = vpop.f32.mrf.mxu0
    %427 = vdwg.mxu0
    %v429 = vunpack.c.l.b16 %v402
    %v430 = vpack.c.b16 %v429, %v429
    %431 = vrot.lane.b32.xlu0 %v430, 96
    %v432 = vpop.permute.xlu0 %431
    %v434 = vsel %vm408, %v402, 0
    %v437 = vsel %vm408, %v432, 0
    %439 = vmatpush.bf16.xpose.msra.mxu0 0
    %440 = vmatpush.bf16.xpose.msra.mxu0 0
    %441 = vmatpush.bf16.xpose.msra.mxu0 0
    %442 = vmatpush.bf16.xpose.msra.mxu0 0
    %443 = vmatpush.bf16.xpose.msra.mxu0 0
    %444 = vmatpush.bf16.xpose.msra.mxu0 0
    %445 = vmatpush.bf16.xpose.msra.mxu0 0
    %446 = vmatpush.bf16.xpose.msra.mxu0 %v437
    %447 = vmatmul.bf16.gmra.mxu0 %v434
    %v448 = vpop.f32.mrf.mxu0
    %v449 = vadd.f32 0.0, %v448
    %v450 = vpop.f32.mrf.mxu0
    %451 = vdwg.mxu0
    %v452 = vmul.f32 %v425, 0.35355338
    %v453 = vmul.f32 %v449, 0.35355338
    %v454 = vadd.f32 %v452, %v395
    %v455 = vadd.f32 %v453, %v396
    %v456 = vsel %vm408, %v454, -inf
    %457 = vmax.xlane.f32.xlu0 %v456
    %v458 = vpop.xlane.xlu0 %457
    %v459 = vsel %vm408, %v455, -inf
    %460 = vmax.xlane.f32.xlu0 %v459
    %v461 = vpop.xlane.xlu0 %460
    %v462 = vsub.f32 %v454, %v458
    %v463 = vsub.f32 %v455, %v461
    %v464 = vmul.f32 %v462, 1.442695
    %v465 = vpow.pop %v464
    %v466 = vmul.f32 %v463, 1.442695
    %v467 = vpow.pop %v466
    %v468 = vsel %vm408, %v465, 0.0
    %469 = vadd.xlane.f32.xlu0 %v468
    %v470 = vpop.xlane.xlu0 %469
    %v471 = vsel %vm408, %v467, 0.0
    %472 = vadd.xlane.f32.xlu0 %v471
    %v473 = vpop.xlane.xlu0 %472
    %v474 = vrcp.pop %v470
    %v475 = vrcp.pop %v473
    %v476 = vmul.f32 %v465, %v474
    %v477 = vmul.f32 %v467, %v475
    %v478 = vpack.c.bf16 %v476, %v476
    %v479 = vpack.c.bf16 %v477, %v477
    %480 = vrot.lane.b32.xlu0 %v405, 64
    %v481 = vpop.permute.xlu0 %480
    %v483 = vsel %vm408, %v478, 0
    %vm485 = vcmask 1043456
    %v487 = vsel %vm485, %v481, 0
    %489 = vmatpush.bf16.msra.mxu0 0
    %490 = vmatpush.bf16.msra.mxu0 0
    %491 = vmatpush.bf16.msra.mxu0 0
    %492 = vmatpush.bf16.msra.mxu0 0
    %493 = vmatpush.bf16.msra.mxu0 0
    %494 = vmatpush.bf16.msra.mxu0 0
    %495 = vmatpush.bf16.msra.mxu0 0
    %496 = vmatpush.bf16.msra.mxu0 %v487
    %497 = vmatmul.bf16.gmra.mxu0 %v483
    %v498 = vpop.f32.mrf.mxu0
    %v499 = vadd.f32 0.0, %v498
    %v500 = vpop.f32.mrf.mxu0
    %501 = vdwg.mxu0
    %502 = vrot.lane.b32.xlu0 %v430, 64
    %v503 = vpop.permute.xlu0 %502
    %v505 = vsel %vm408, %v479, 0
    %v508 = vsel %vm485, %v503, 0
    %510 = vmatpush.bf16.msra.mxu0 0
    %511 = vmatpush.bf16.msra.mxu0 0
    %512 = vmatpush.bf16.msra.mxu0 0
    %513 = vmatpush.bf16.msra.mxu0 0
    %514 = vmatpush.bf16.msra.mxu0 0
    %515 = vmatpush.bf16.msra.mxu0 0
    %516 = vmatpush.bf16.msra.mxu0 0
    %517 = vmatpush.bf16.msra.mxu0 %v508
    %518 = vmatmul.bf16.gmra.mxu0 %v505
    %v519 = vpop.f32.mrf.mxu0
    %v520 = vadd.f32 0.0, %v519
    %v521 = vpop.f32.mrf.mxu0
    %522 = vdwg.mxu0
    %v523 = vpack.c.bf16 %v397, %v397
    %v524 = vpack.c.bf16 %v520, %v499
    %525 = vrot.lane.b32.xlu0 %v405, 120
    %v526 = vpop.permute.xlu0 %525
    %527 = vrot.lane.b32.xlu0 %v405, 88
    %v528 = vpop.permute.xlu0 %527
    %v530 = vsel %vm408, %v526, 0
    %v533 = vsel %vm408, %v528, 0
    %535 = vmatpush.bf16.xpose.msra.mxu0 0
    %536 = vmatpush.bf16.xpose.msra.mxu0 0
    %537 = vmatpush.bf16.xpose.msra.mxu0 0
    %538 = vmatpush.bf16.xpose.msra.mxu0 0
    %539 = vmatpush.bf16.xpose.msra.mxu0 0
    %540 = vmatpush.bf16.xpose.msra.mxu0 0
    %541 = vmatpush.bf16.xpose.msra.mxu0 0
    %542 = vmatpush.bf16.xpose.msra.mxu0 %v533
    %543 = vmatmul.bf16.gmra.mxu0 %v530
    %v544 = vpop.f32.mrf.mxu0
    %v545 = vadd.f32 0.0, %v544
    %v546 = vpop.f32.mrf.mxu0
    %547 = vdwg.mxu0
    %548 = vrot.lane.b32.xlu0 %v430, 120
    %v549 = vpop.permute.xlu0 %548
    %550 = vrot.lane.b32.xlu0 %v430, 88
    %v551 = vpop.permute.xlu0 %550
    %v553 = vsel %vm408, %v549, 0
    %v556 = vsel %vm408, %v551, 0
    %558 = vmatpush.bf16.xpose.msra.mxu0 0
    %559 = vmatpush.bf16.xpose.msra.mxu0 0
    %560 = vmatpush.bf16.xpose.msra.mxu0 0
    %561 = vmatpush.bf16.xpose.msra.mxu0 0
    %562 = vmatpush.bf16.xpose.msra.mxu0 0
    %563 = vmatpush.bf16.xpose.msra.mxu0 0
    %564 = vmatpush.bf16.xpose.msra.mxu0 0
    %565 = vmatpush.bf16.xpose.msra.mxu0 %v556
    %566 = vmatmul.bf16.gmra.mxu0 %v553
    %v567 = vpop.f32.mrf.mxu0
    %v568 = vadd.f32 0.0, %v567
    %v569 = vpop.f32.mrf.mxu0
    %570 = vdwg.mxu0
    %v571 = vmul.f32 %v545, 0.35355338
    %v572 = vmul.f32 %v568, 0.35355338
    %v573 = vadd.f32 %v571, %v395
    %v574 = vadd.f32 %v572, %v396
    %v575 = vsel %vm408, %v573, -inf
    %576 = vmax.xlane.f32.xlu0 %v575
    %v577 = vpop.xlane.xlu0 %576
    %v578 = vsel %vm408, %v574, -inf
    %579 = vmax.xlane.f32.xlu0 %v578
    %v580 = vpop.xlane.xlu0 %579
    %v581 = vsub.f32 %v573, %v577
    %v582 = vsub.f32 %v574, %v580
    %v583 = vmul.f32 %v581, 1.442695
    %v584 = vpow.pop %v583
    %v585 = vmul.f32 %v582, 1.442695
    %v586 = vpow.pop %v585
    %v587 = vsel %vm408, %v584, 0.0
    %588 = vadd.xlane.f32.xlu0 %v587
    %v589 = vpop.xlane.xlu0 %588
    %v590 = vsel %vm408, %v586, 0.0
    %591 = vadd.xlane.f32.xlu0 %v590
    %v592 = vpop.xlane.xlu0 %591
    %v593 = vrcp.pop %v589
    %v594 = vrcp.pop %v592
    %v595 = vmul.f32 %v584, %v593
    %v596 = vmul.f32 %v586, %v594
    %v597 = vpack.c.bf16 %v595, %v595
    %v598 = vpack.c.bf16 %v596, %v596
    %599 = vrot.lane.b32.xlu0 %v405, 56
    %v600 = vpop.permute.xlu0 %599
    %v602 = vsel %vm408, %v597, 0
    %v605 = vsel %vm485, %v600, 0
    %607 = vmatpush.bf16.msra.mxu0 0
    %608 = vmatpush.bf16.msra.mxu0 0
    %609 = vmatpush.bf16.msra.mxu0 0
    %610 = vmatpush.bf16.msra.mxu0 0
    %611 = vmatpush.bf16.msra.mxu0 0
    %612 = vmatpush.bf16.msra.mxu0 0
    %613 = vmatpush.bf16.msra.mxu0 0
    %614 = vmatpush.bf16.msra.mxu0 %v605
    %615 = vmatmul.bf16.gmra.mxu0 %v602
    %v616 = vpop.f32.mrf.mxu0
    %v617 = vadd.f32 0.0, %v616
    %v618 = vpop.f32.mrf.mxu0
    %619 = vdwg.mxu0
    %620 = vrot.lane.b32.xlu0 %v430, 56
    %v621 = vpop.permute.xlu0 %620
    %v623 = vsel %vm408, %v598, 0
    %v626 = vsel %vm485, %v621, 0
    %628 = vmatpush.bf16.msra.mxu0 0
    %629 = vmatpush.bf16.msra.mxu0 0
    %630 = vmatpush.bf16.msra.mxu0 0
    %631 = vmatpush.bf16.msra.mxu0 0
    %632 = vmatpush.bf16.msra.mxu0 0
    %633 = vmatpush.bf16.msra.mxu0 0
    %634 = vmatpush.bf16.msra.mxu0 0
    %635 = vmatpush.bf16.msra.mxu0 %v626
    %636 = vmatmul.bf16.gmra.mxu0 %v623
    %v637 = vpop.f32.mrf.mxu0
    %v638 = vadd.f32 0.0, %v637
    %v639 = vpop.f32.mrf.mxu0
    %640 = vdwg.mxu0
    %v641 = vpack.c.bf16 %v398, %v398
    %v642 = vpack.c.bf16 %v638, %v617
    %v644 = vsel %vm408, %v642, 0
    %v647 = vsel %vm485, %v641, 0
    %649 = vmatpush.bf16.msra.mxu0 0
    %650 = vmatpush.bf16.msra.mxu0 0
    %651 = vmatpush.bf16.msra.mxu0 0
    %652 = vmatpush.bf16.msra.mxu0 0
    %653 = vmatpush.bf16.msra.mxu0 0
    %654 = vmatpush.bf16.msra.mxu0 0
    %655 = vmatpush.bf16.msra.mxu0 0
    %656 = vmatpush.bf16.msra.mxu0 %v647
    %657 = vmatmul.bf16.gmra.mxu0 %v644
    %v658 = vpop.f32.mrf.mxu0
    %v659 = vadd.f32 0.0, %v658
    %v660 = vpop.f32.mrf.mxu0
    %v661 = vadd.f32 0.0, %v660
    %662 = vdwg.mxu0
    %v664 = vsel %vm408, %v524, 0
    %v667 = vsel %vm485, %v523, 0
    %669 = vmatpush.bf16.msra.mxu0 0
    %670 = vmatpush.bf16.msra.mxu0 0
    %671 = vmatpush.bf16.msra.mxu0 0
    %672 = vmatpush.bf16.msra.mxu0 0
    %673 = vmatpush.bf16.msra.mxu0 0
    %674 = vmatpush.bf16.msra.mxu0 0
    %675 = vmatpush.bf16.msra.mxu0 0
    %676 = vmatpush.bf16.msra.mxu0 %v667
    %677 = vmatmul.bf16.gmra.mxu0 %v664
    %v678 = vpop.f32.mrf.mxu0
    %v679 = vadd.f32 %v659, %v678
    %v680 = vpop.f32.mrf.mxu0
    %v681 = vadd.f32 %v661, %v680
    %682 = vdwg.mxu0
    %683 = vrot.lane.b32.xlu0 %v405, 112
    %v684 = vpop.permute.xlu0 %683
    %685 = vrot.lane.b32.xlu0 %v405, 80
    %v686 = vpop.permute.xlu0 %685
    %v688 = vsel %vm408, %v684, 0
    %v691 = vsel %vm408, %v686, 0
    %693 = vmatpush.bf16.xpose.msra.mxu0 0
    %694 = vmatpush.bf16.xpose.msra.mxu0 0
    %695 = vmatpush.bf16.xpose.msra.mxu0 0
    %696 = vmatpush.bf16.xpose.msra.mxu0 0
    %697 = vmatpush.bf16.xpose.msra.mxu0 0
    %698 = vmatpush.bf16.xpose.msra.mxu0 0
    %699 = vmatpush.bf16.xpose.msra.mxu0 0
    %700 = vmatpush.bf16.xpose.msra.mxu0 %v691
    %701 = vmatmul.bf16.gmra.mxu0 %v688
    %v702 = vpop.f32.mrf.mxu0
    %v703 = vadd.f32 0.0, %v702
    %v704 = vpop.f32.mrf.mxu0
    %705 = vdwg.mxu0
    %706 = vrot.lane.b32.xlu0 %v430, 112
    %v707 = vpop.permute.xlu0 %706
    %708 = vrot.lane.b32.xlu0 %v430, 80
    %v709 = vpop.permute.xlu0 %708
    %v711 = vsel %vm408, %v707, 0
    %v714 = vsel %vm408, %v709, 0
    %716 = vmatpush.bf16.xpose.msra.mxu0 0
    %717 = vmatpush.bf16.xpose.msra.mxu0 0
    %718 = vmatpush.bf16.xpose.msra.mxu0 0
    %719 = vmatpush.bf16.xpose.msra.mxu0 0
    %720 = vmatpush.bf16.xpose.msra.mxu0 0
    %721 = vmatpush.bf16.xpose.msra.mxu0 0
    %722 = vmatpush.bf16.xpose.msra.mxu0 0
    %723 = vmatpush.bf16.xpose.msra.mxu0 %v714
    %724 = vmatmul.bf16.gmra.mxu0 %v711
    %v725 = vpop.f32.mrf.mxu0
    %v726 = vadd.f32 0.0, %v725
    %v727 = vpop.f32.mrf.mxu0
    %728 = vdwg.mxu0
    %v729 = vmul.f32 %v703, 0.35355338
    %v730 = vmul.f32 %v726, 0.35355338
    %v731 = vadd.f32 %v729, %v395
    %v732 = vadd.f32 %v730, %v396
    %v733 = vsel %vm408, %v731, -inf
    %734 = vmax.xlane.f32.xlu0 %v733
    %v735 = vpop.xlane.xlu0 %734
    %v736 = vsel %vm408, %v732, -inf
    %737 = vmax.xlane.f32.xlu0 %v736
    %v738 = vpop.xlane.xlu0 %737
    %v739 = vsub.f32 %v731, %v735
    %v740 = vsub.f32 %v732, %v738
    %v741 = vmul.f32 %v739, 1.442695
    %v742 = vpow.pop %v741
    %v743 = vmul.f32 %v740, 1.442695
    %v744 = vpow.pop %v743
    %v745 = vsel %vm408, %v742, 0.0
    %746 = vadd.xlane.f32.xlu0 %v745
    %v747 = vpop.xlane.xlu0 %746
    %v748 = vsel %vm408, %v744, 0.0
    %749 = vadd.xlane.f32.xlu0 %v748
    %v750 = vpop.xlane.xlu0 %749
    %v751 = vrcp.pop %v747
    %v752 = vrcp.pop %v750
    %v753 = vmul.f32 %v742, %v751
    %v754 = vmul.f32 %v744, %v752
    %v755 = vpack.c.bf16 %v753, %v753
    %v756 = vpack.c.bf16 %v754, %v754
    %757 = vrot.lane.b32.xlu0 %v405, 48
    %v758 = vpop.permute.xlu0 %757
    %v760 = vsel %vm408, %v755, 0
    %v763 = vsel %vm485, %v758, 0
    %765 = vmatpush.bf16.msra.mxu0 0
    %766 = vmatpush.bf16.msra.mxu0 0
    %767 = vmatpush.bf16.msra.mxu0 0
    %768 = vmatpush.bf16.msra.mxu0 0
    %769 = vmatpush.bf16.msra.mxu0 0
    %770 = vmatpush.bf16.msra.mxu0 0
    %771 = vmatpush.bf16.msra.mxu0 0
    %772 = vmatpush.bf16.msra.mxu0 %v763
    %773 = vmatmul.bf16.gmra.mxu0 %v760
    %v774 = vpop.f32.mrf.mxu0
    %v775 = vadd.f32 0.0, %v774
    %v776 = vpop.f32.mrf.mxu0
    %777 = vdwg.mxu0
    %778 = vrot.lane.b32.xlu0 %v430, 48
    %v779 = vpop.permute.xlu0 %778
    %v781 = vsel %vm408, %v756, 0
    %v784 = vsel %vm485, %v779, 0
    %786 = vmatpush.bf16.msra.mxu0 0
    %787 = vmatpush.bf16.msra.mxu0 0
    %788 = vmatpush.bf16.msra.mxu0 0
    %789 = vmatpush.bf16.msra.mxu0 0
    %790 = vmatpush.bf16.msra.mxu0 0
    %791 = vmatpush.bf16.msra.mxu0 0
    %792 = vmatpush.bf16.msra.mxu0 0
    %793 = vmatpush.bf16.msra.mxu0 %v784
    %794 = vmatmul.bf16.gmra.mxu0 %v781
    %v795 = vpop.f32.mrf.mxu0
    %v796 = vadd.f32 0.0, %v795
    %v797 = vpop.f32.mrf.mxu0
    %798 = vdwg.mxu0
    %v799 = vpack.c.bf16 %v399, %v399
    %v800 = vpack.c.bf16 %v796, %v775
    %v802 = vsel %vm408, %v800, 0
    %v805 = vsel %vm485, %v799, 0
    %807 = vmatpush.bf16.msra.mxu0 0
    %808 = vmatpush.bf16.msra.mxu0 0
    %809 = vmatpush.bf16.msra.mxu0 0
    %810 = vmatpush.bf16.msra.mxu0 0
    %811 = vmatpush.bf16.msra.mxu0 0
    %812 = vmatpush.bf16.msra.mxu0 0
    %813 = vmatpush.bf16.msra.mxu0 0
    %814 = vmatpush.bf16.msra.mxu0 %v805
    %815 = vmatmul.bf16.gmra.mxu0 %v802
    %v816 = vpop.f32.mrf.mxu0
    %v817 = vadd.f32 0.0, %v816
    %v818 = vpop.f32.mrf.mxu0
    %v819 = vadd.f32 0.0, %v818
    %820 = vdwg.mxu0
    %v821 = vadd.f32 %v679, %v817
    %v822 = vadd.f32 %v681, %v819
    %823 = vrot.lane.b32.xlu0 %v405, 104
    %v824 = vpop.permute.xlu0 %823
    %825 = vrot.lane.b32.xlu0 %v405, 72
    %v826 = vpop.permute.xlu0 %825
    %v828 = vsel %vm408, %v824, 0
    %v831 = vsel %vm408, %v826, 0
    %833 = vmatpush.bf16.xpose.msra.mxu0 0
    %834 = vmatpush.bf16.xpose.msra.mxu0 0
    %835 = vmatpush.bf16.xpose.msra.mxu0 0
    %836 = vmatpush.bf16.xpose.msra.mxu0 0
    %837 = vmatpush.bf16.xpose.msra.mxu0 0
    %838 = vmatpush.bf16.xpose.msra.mxu0 0
    %839 = vmatpush.bf16.xpose.msra.mxu0 0
    %840 = vmatpush.bf16.xpose.msra.mxu0 %v831
    %841 = vmatmul.bf16.gmra.mxu0 %v828
    %v842 = vpop.f32.mrf.mxu0
    %v843 = vadd.f32 0.0, %v842
    %v844 = vpop.f32.mrf.mxu0
    %845 = vdwg.mxu0
    %846 = vrot.lane.b32.xlu0 %v430, 104
    %v847 = vpop.permute.xlu0 %846
    %848 = vrot.lane.b32.xlu0 %v430, 72
    %v849 = vpop.permute.xlu0 %848
    %v851 = vsel %vm408, %v847, 0
    %v854 = vsel %vm408, %v849, 0
    %856 = vmatpush.bf16.xpose.msra.mxu0 0
    %857 = vmatpush.bf16.xpose.msra.mxu0 0
    %858 = vmatpush.bf16.xpose.msra.mxu0 0
    %859 = vmatpush.bf16.xpose.msra.mxu0 0
    %860 = vmatpush.bf16.xpose.msra.mxu0 0
    %861 = vmatpush.bf16.xpose.msra.mxu0 0
    %862 = vmatpush.bf16.xpose.msra.mxu0 0
    %863 = vmatpush.bf16.xpose.msra.mxu0 %v854
    %864 = vmatmul.bf16.gmra.mxu0 %v851
    %v865 = vpop.f32.mrf.mxu0
    %v866 = vadd.f32 0.0, %v865
    %v867 = vpop.f32.mrf.mxu0
    %868 = vdwg.mxu0
    %v869 = vmul.f32 %v843, 0.35355338
    %v870 = vmul.f32 %v866, 0.35355338
    %v871 = vadd.f32 %v869, %v395
    %v872 = vadd.f32 %v870, %v396
    %v873 = vsel %vm408, %v871, -inf
    %874 = vmax.xlane.f32.xlu0 %v873
    %v875 = vpop.xlane.xlu0 %874
    %v876 = vsel %vm408, %v872, -inf
    %877 = vmax.xlane.f32.xlu0 %v876
    %v878 = vpop.xlane.xlu0 %877
    %v879 = vsub.f32 %v871, %v875
    %v880 = vsub.f32 %v872, %v878
    %v881 = vmul.f32 %v879, 1.442695
    %v882 = vpow.pop %v881
    %v883 = vmul.f32 %v880, 1.442695
    %v884 = vpow.pop %v883
    %v885 = vsel %vm408, %v882, 0.0
    %886 = vadd.xlane.f32.xlu0 %v885
    %v887 = vpop.xlane.xlu0 %886
    %v888 = vsel %vm408, %v884, 0.0
    %889 = vadd.xlane.f32.xlu0 %v888
    %v890 = vpop.xlane.xlu0 %889
    %v891 = vrcp.pop %v887
    %v892 = vrcp.pop %v890
    %v893 = vmul.f32 %v882, %v891
    %v894 = vmul.f32 %v884, %v892
    %v895 = vpack.c.bf16 %v893, %v893
    %v896 = vpack.c.bf16 %v894, %v894
    %897 = vrot.lane.b32.xlu0 %v405, 40
    %v898 = vpop.permute.xlu0 %897
    %v900 = vsel %vm408, %v895, 0
    %v903 = vsel %vm485, %v898, 0
    %905 = vmatpush.bf16.msra.mxu0 0
    %906 = vmatpush.bf16.msra.mxu0 0
    %907 = vmatpush.bf16.msra.mxu0 0
    %908 = vmatpush.bf16.msra.mxu0 0
    %909 = vmatpush.bf16.msra.mxu0 0
    %910 = vmatpush.bf16.msra.mxu0 0
    %911 = vmatpush.bf16.msra.mxu0 0
    %912 = vmatpush.bf16.msra.mxu0 %v903
    %913 = vmatmul.bf16.gmra.mxu0 %v900
    %v914 = vpop.f32.mrf.mxu0
    %v915 = vadd.f32 0.0, %v914
    %v916 = vpop.f32.mrf.mxu0
    %917 = vdwg.mxu0
    %918 = vrot.lane.b32.xlu0 %v430, 40
    %v919 = vpop.permute.xlu0 %918
    %v921 = vsel %vm408, %v896, 0
    %v924 = vsel %vm485, %v919, 0
    %926 = vmatpush.bf16.msra.mxu0 0
    %927 = vmatpush.bf16.msra.mxu0 0
    %928 = vmatpush.bf16.msra.mxu0 0
    %929 = vmatpush.bf16.msra.mxu0 0
    %930 = vmatpush.bf16.msra.mxu0 0
    %931 = vmatpush.bf16.msra.mxu0 0
    %932 = vmatpush.bf16.msra.mxu0 0
    %933 = vmatpush.bf16.msra.mxu0 %v924
    %934 = vmatmul.bf16.gmra.mxu0 %v921
    %v935 = vpop.f32.mrf.mxu0
    %v936 = vadd.f32 0.0, %v935
    %v937 = vpop.f32.mrf.mxu0
    %938 = vdwg.mxu0
    %v939 = vpack.c.bf16 %v400, %v400
    %v940 = vpack.c.bf16 %v936, %v915
    %v942 = vsel %vm408, %v940, 0
    %v945 = vsel %vm485, %v939, 0
    %947 = vmatpush.bf16.msra.mxu0 0
    %948 = vmatpush.bf16.msra.mxu0 0
    %949 = vmatpush.bf16.msra.mxu0 0
    %950 = vmatpush.bf16.msra.mxu0 0
    %951 = vmatpush.bf16.msra.mxu0 0
    %952 = vmatpush.bf16.msra.mxu0 0
    %953 = vmatpush.bf16.msra.mxu0 0
    %954 = vmatpush.bf16.msra.mxu0 %v945
    %955 = vmatmul.bf16.gmra.mxu0 %v942
    %v956 = vpop.f32.mrf.mxu0
    %v957 = vadd.f32 0.0, %v956
    %v958 = vpop.f32.mrf.mxu0
    %v959 = vadd.f32 0.0, %v958
    %960 = vdwg.mxu0
    %v961 = vadd.f32 %v821, %v957
    %v962 = vadd.f32 %v822, %v959
    %v963 = vld [vmem:[#allocation13] sm:$0x1]
    %v965 = vperm.slane %v963, 0
    %v967 = vadd.f32 %v961, %v965
    %v968 = vadd.f32 %v962, %v965
    %v969 = vadd.f32 %v352, %v967
    %v970 = vadd.f32 %v353, %v968
    %v971 = vsel %vm377, %v969, 0.0
    %972 = vadd.xlane.f32.xlu0 %v971
    %v973 = vpop.xlane.xlu0 %972
    %v974 = vsel %vm377, %v970, 0.0
    %975 = vadd.xlane.f32.xlu0 %v974
    %v976 = vpop.xlane.xlu0 %975
    %v977 = vrcp.pop 32.0
    %v978 = vmul.f32 32.0, %v977
    %v979 = vsub.f32 1.0, %v978
    %v980 = vmul.f32 %v977, %v979
    %v981 = vadd.f32 %v977, %v980
    %vm982 = vweird.f32 %v977
    %v983 = vsel %vm982, %v977, %v981
    %v984 = vmul.f32 %v973, %v983
    %v985 = vmul.f32 %v976, %v983
    %v986 = vsub.f32 %v969, %v984
    %v987 = vsub.f32 %v970, %v985
    %v988 = vmul.f32 %v986, %v986
    %v989 = vmul.f32 %v987, %v987
    %v990 = vsel %vm377, %v988, 0.0
    %991 = vadd.xlane.f32.xlu0 %v990
    %v992 = vpop.xlane.xlu0 %991
    %v993 = vsel %vm377, %v989, 0.0
    %994 = vadd.xlane.f32.xlu0 %v993
    %v995 = vpop.xlane.xlu0 %994
    %v996 = vmul.f32 %v992, %v983
    %v997 = vmul.f32 %v995, %v983
    %v998 = vadd.f32 %v996, 1e-05
    %v999 = vadd.f32 %v997, 1e-05
    %v1000 = vrsqrt.pop %v998
    %v1001 = vmul.f32 %v1000, %v998
    %v1002 = vmul.f32 %v1001, %v1000
    %v1003 = vmul.f32 0.5, %v1002
    %v1004 = vsub.f32 1.5, %v1003
    %v1005 = vmul.f32 %v1000, %v1004
    %vm1006 = vweird.f32 %v998
    %vm1007 = vweird.f32 %v1000
    %vm1008 = vmor %vm1006, %vm1007
    %v1009 = vsel %vm1008, %v1000, %v1005
    %v1010 = vrsqrt.pop %v999
    %v1011 = vmul.f32 %v1010, %v999
    %v1012 = vmul.f32 %v1011, %v1010
    %v1013 = vmul.f32 0.5, %v1012
    %v1014 = vsub.f32 1.5, %v1013
    %v1015 = vmul.f32 %v1010, %v1014
    %vm1016 = vweird.f32 %v999
    %vm1017 = vweird.f32 %v1010
    %vm1018 = vmor %vm1016, %vm1017
    %v1019 = vsel %vm1018, %v1010, %v1015
    %v1020 = vmul.f32 %v986, %v1009
    %v1021 = vmul.f32 %v987, %v1019
    %v1022 = vld [vmem:[#allocation26] sm:$0x1]
    %v1024 = vperm.slane %v1022, 0
    %v1026 = vmul.f32 %v1020, %v1024
    %v1027 = vmul.f32 %v1021, %v1024
    %v1028 = vld [vmem:[#allocation28] sm:$0x1]
    %v1030 = vperm.slane %v1028, 0
    %v1032 = vadd.f32 %v1026, %v1030
    %v1033 = vadd.f32 %v1027, %v1030
    %v1034 = vpack.c.bf16 %v1033, %v1032
    %v1035 = vld [vmem:[#allocation14] sm:$0xf]
    %v1036 = vld [vmem:[#allocation14 + $0x4] sm:$0xf]
    %v1037 = vld [vmem:[#allocation14 + $0x8] sm:$0xf]
    %v1038 = vld [vmem:[#allocation14 + $0xc] sm:$0xf]
    %v1039 = vld [vmem:[#allocation16] sm:$0x1]
    %v1041 = vperm.slane %v1039, 0
    %v1047 = vunpack.c.l.b16 %v1035
    %v1048 = vunpack.c.l.b16 %v1036
    %v1049 = vunpack.c.l.b16 %v1037
    %v1050 = vunpack.c.l.b16 %v1038
    %v1051 = vpack.c.b16 %v1048, %v1047
    %v1052 = vpack.c.b16 %v1050, %v1049
    %v1056 = vsel %vm377, %v1034, 0
    %1058 = vmatpush.bf16.msra.mxu0 0
    %1059 = vmatpush.bf16.msra.mxu0 0
    %1060 = vmatpush.bf16.msra.mxu0 0
    %1061 = vmatpush.bf16.msra.mxu0 0
    %1062 = vmatpush.bf16.msra.mxu0 0
    %1063 = vmatpush.bf16.msra.mxu0 0
    %1064 = vmatpush.bf16.msra.mxu0 %v1052
    %1065 = vmatpush.bf16.msra.mxu0 %v1051
    %1066 = vmatmul.bf16.gmra.mxu0 %v1056
    %v1067 = vpop.f32.mrf.mxu0
    %v1068 = vadd.f32 %v1041, %v1067
    %v1069 = vpop.f32.mrf.mxu0
    %v1070 = vadd.f32 %v1041, %v1069
    %1071 = vdwg.mxu0
    %v1072 = vpack.c.bf16 %v355, %v354
    %v1073 = vld [vmem:[#allocation17] sm:$0xf]
    %v1074 = vld [vmem:[#allocation17 + $0x4] sm:$0xf]
    %v1075 = vld [vmem:[#allocation17 + $0x8] sm:$0xf]
    %v1076 = vld [vmem:[#allocation17 + $0xc] sm:$0xf]
    %v1077 = vld [vmem:[#allocation19] sm:$0x1]
    %v1079 = vperm.slane %v1077, 0
    %v1085 = vunpack.c.l.b16 %v1073
    %v1086 = vunpack.c.l.b16 %v1074
    %v1087 = vunpack.c.l.b16 %v1075
    %v1088 = vunpack.c.l.b16 %v1076
    %v1089 = vpack.c.b16 %v1086, %v1085
    %v1090 = vpack.c.b16 %v1088, %v1087
    %v1094 = vsel %vm377, %v1072, 0
    %1096 = vmatpush.bf16.msra.mxu0 0
    %1097 = vmatpush.bf16.msra.mxu0 0
    %1098 = vmatpush.bf16.msra.mxu0 0
    %1099 = vmatpush.bf16.msra.mxu0 0
    %1100 = vmatpush.bf16.msra.mxu0 0
    %1101 = vmatpush.bf16.msra.mxu0 0
    %1102 = vmatpush.bf16.msra.mxu0 %v1090
    %1103 = vmatpush.bf16.msra.mxu0 %v1089
    %1104 = vmatmul.bf16.gmra.mxu0 %v1094
    %v1105 = vpop.f32.mrf.mxu0
    %v1106 = vadd.f32 %v1079, %v1105
    %v1107 = vpop.f32.mrf.mxu0
    %v1108 = vadd.f32 %v1079, %v1107
    %1109 = vdwg.mxu0
    %v1110 = vld [vmem:[#allocation8] sm:$0xff]
    %v1111 = vld [vmem:[#allocation8 + $0x8] sm:$0xff]
    %v1112 = vld [vmem:[%s12] sm:$0xff]
    %v1113 = vld [vmem:[%s12 + $0x8] sm:$0xff]
    %v1114 = vld [vmem:[%s12 + $0x10] sm:$0xff]
    %v1115 = vld [vmem:[%s12 + $0x18] sm:$0xff]
    %v1116 = vpack.c.bf16 %v1068, %v1068
    %v1117 = vpack.c.bf16 %v1070, %v1070
    %v1118 = vpack.c.bf16 %v1106, %v1106
    %v1119 = vpack.c.bf16 %v1108, %v1108
    %v1121 = vsel %vm408, %v1116, 0
    %v1124 = vsel %vm408, %v1118, 0
    %1126 = vmatpush.bf16.xpose.msra.mxu0 0
    %1127 = vmatpush.bf16.xpose.msra.mxu0 0
    %1128 = vmatpush.bf16.xpose.msra.mxu0 0
    %1129 = vmatpush.bf16.xpose.msra.mxu0 0
    %1130 = vmatpush.bf16.xpose.msra.mxu0 0
    %1131 = vmatpush.bf16.xpose.msra.mxu0 0
    %1132 = vmatpush.bf16.xpose.msra.mxu0 0
    %1133 = vmatpush.bf16.xpose.msra.mxu0 %v1124
    %1134 = vmatmul.bf16.gmra.mxu0 %v1121
    %v1135 = vpop.f32.mrf.mxu0
    %v1136 = vadd.f32 0.0, %v1135
    %v1137 = vpop.f32.mrf.mxu0
    %1138 = vdwg.mxu0
    %v1140 = vsel %vm408, %v1117, 0
    %v1143 = vsel %vm408, %v1119, 0
    %1145 = vmatpush.bf16.xpose.msra.mxu0 0
    %1146 = vmatpush.bf16.xpose.msra.mxu0 0
    %1147 = vmatpush.bf16.xpose.msra.mxu0 0
    %1148 = vmatpush.bf16.xpose.msra.mxu0 0
    %1149 = vmatpush.bf16.xpose.msra.mxu0 0
    %1150 = vmatpush.bf16.xpose.msra.mxu0 0
    %1151 = vmatpush.bf16.xpose.msra.mxu0 0
    %1152 = vmatpush.bf16.xpose.msra.mxu0 %v1143
    %1153 = vmatmul.bf16.gmra.mxu0 %v1140
    %v1154 = vpop.f32.mrf.mxu0
    %v1155 = vadd.f32 0.0, %v1154
    %v1156 = vpop.f32.mrf.mxu0
    %1157 = vdwg.mxu0
    %v1158 = vmul.f32 %v1136, 0.35355338
    %v1159 = vmul.f32 %v1155, 0.35355338
    %v1160 = vadd.f32 %v1158, %v1110
    %v1161 = vadd.f32 %v1159, %v1111
    %v1162 = vsel %vm408, %v1160, -inf
    %1163 = vmax.xlane.f32.xlu0 %v1162
    %v1164 = vpop.xlane.xlu0 %1163
    %v1165 = vsel %vm408, %v1161, -inf
    %1166 = vmax.xlane.f32.xlu0 %v1165
    %v1167 = vpop.xlane.xlu0 %1166
    %v1168 = vsub.f32 %v1160, %v1164
    %v1169 = vsub.f32 %v1161, %v1167
    %v1170 = vmul.f32 %v1168, 1.442695
    %v1171 = vpow.pop %v1170
    %v1172 = vmul.f32 %v1169, 1.442695
    %v1173 = vpow.pop %v1172
    %v1174 = vsel %vm408, %v1171, 0.0
    %1175 = vadd.xlane.f32.xlu0 %v1174
    %v1176 = vpop.xlane.xlu0 %1175
    %v1177 = vsel %vm408, %v1173, 0.0
    %1178 = vadd.xlane.f32.xlu0 %v1177
    %v1179 = vpop.xlane.xlu0 %1178
    %v1180 = vrcp.pop %v1176
    %v1181 = vrcp.pop %v1179
    %v1182 = vmul.f32 %v1171, %v1180
    %v1183 = vmul.f32 %v1173, %v1181
    %v1184 = vpack.c.bf16 %v1182, %v1182
    %v1185 = vpack.c.bf16 %v1183, %v1183
    %v1187 = vunpack.c.l.b16 %v1118
    %v1188 = vpack.c.b16 %v1187, %v1187
    %1189 = vrot.lane.b32.xlu0 %v1188, 96
    %v1190 = vpop.permute.xlu0 %1189
    %v1192 = vsel %vm408, %v1184, 0
    %v1195 = vsel %vm485, %v1190, 0
    %1197 = vmatpush.bf16.msra.mxu0 0
    %1198 = vmatpush.bf16.msra.mxu0 0
    %1199 = vmatpush.bf16.msra.mxu0 0
    %1200 = vmatpush.bf16.msra.mxu0 0
    %1201 = vmatpush.bf16.msra.mxu0 0
    %1202 = vmatpush.bf16.msra.mxu0 0
    %1203 = vmatpush.bf16.msra.mxu0 0
    %1204 = vmatpush.bf16.msra.mxu0 %v1195
    %1205 = vmatmul.bf16.gmra.mxu0 %v1192
    %v1206 = vpop.f32.mrf.mxu0
    %v1207 = vadd.f32 0.0, %v1206
    %v1208 = vpop.f32.mrf.mxu0
    %1209 = vdwg.mxu0
    %v1211 = vunpack.c.l.b16 %v1119
    %v1212 = vpack.c.b16 %v1211, %v1211
    %1213 = vrot.lane.b32.xlu0 %v1212, 96
    %v1214 = vpop.permute.xlu0 %1213
    %v1216 = vsel %vm408, %v1185, 0
    %v1219 = vsel %vm485, %v1214, 0
    %1221 = vmatpush.bf16.msra.mxu0 0
    %1222 = vmatpush.bf16.msra.mxu0 0
    %1223 = vmatpush.bf16.msra.mxu0 0
    %1224 = vmatpush.bf16.msra.mxu0 0
    %1225 = vmatpush.bf16.msra.mxu0 0
    %1226 = vmatpush.bf16.msra.mxu0 0
    %1227 = vmatpush.bf16.msra.mxu0 0
    %1228 = vmatpush.bf16.msra.mxu0 %v1219
    %1229 = vmatmul.bf16.gmra.mxu0 %v1216
    %v1230 = vpop.f32.mrf.mxu0
    %v1231 = vadd.f32 0.0, %v1230
    %v1232 = vpop.f32.mrf.mxu0
    %1233 = vdwg.mxu0
    %v1234 = vpack.c.bf16 %v1112, %v1112
    %v1235 = vpack.c.bf16 %v1231, %v1207
    %v1237 = vunpack.c.l.b16 %v1116
    %v1238 = vpack.c.b16 %v1237, %v1237
    %1239 = vrot.lane.b32.xlu0 %v1238, 120
    %v1240 = vpop.permute.xlu0 %1239
    %1241 = vrot.lane.b32.xlu0 %v1188, 120
    %v1242 = vpop.permute.xlu0 %1241
    %v1244 = vsel %vm408, %v1240, 0
    %v1247 = vsel %vm408, %v1242, 0
    %1249 = vmatpush.bf16.xpose.msra.mxu0 0
    %1250 = vmatpush.bf16.xpose.msra.mxu0 0
    %1251 = vmatpush.bf16.xpose.msra.mxu0 0
    %1252 = vmatpush.bf16.xpose.msra.mxu0 0
    %1253 = vmatpush.bf16.xpose.msra.mxu0 0
    %1254 = vmatpush.bf16.xpose.msra.mxu0 0
    %1255 = vmatpush.bf16.xpose.msra.mxu0 0
    %1256 = vmatpush.bf16.xpose.msra.mxu0 %v1247
    %1257 = vmatmul.bf16.gmra.mxu0 %v1244
    %v1258 = vpop.f32.mrf.mxu0
    %v1259 = vadd.f32 0.0, %v1258
    %v1260 = vpop.f32.mrf.mxu0
    %1261 = vdwg.mxu0
    %v1263 = vunpack.c.l.b16 %v1117
    %v1264 = vpack.c.b16 %v1263, %v1263
    %1265 = vrot.lane.b32.xlu0 %v1264, 120
    %v1266 = vpop.permute.xlu0 %1265
    %1267 = vrot.lane.b32.xlu0 %v1212, 120
    %v1268 = vpop.permute.xlu0 %1267
    %v1270 = vsel %vm408, %v1266, 0
    %v1273 = vsel %vm408, %v1268, 0
    %1275 = vmatpush.bf16.xpose.msra.mxu0 0
    %1276 = vmatpush.bf16.xpose.msra.mxu0 0
    %1277 = vmatpush.bf16.xpose.msra.mxu0 0
    %1278 = vmatpush.bf16.xpose.msra.mxu0 0
    %1279 = vmatpush.bf16.xpose.msra.mxu0 0
    %1280 = vmatpush.bf16.xpose.msra.mxu0 0
    %1281 = vmatpush.bf16.xpose.msra.mxu0 0
    %1282 = vmatpush.bf16.xpose.msra.mxu0 %v1273
    %1283 = vmatmul.bf16.gmra.mxu0 %v1270
    %v1284 = vpop.f32.mrf.mxu0
    %v1285 = vadd.f32 0.0, %v1284
    %v1286 = vpop.f32.mrf.mxu0
    %1287 = vdwg.mxu0
    %v1288 = vmul.f32 %v1259, 0.35355338
    %v1289 = vmul.f32 %v1285, 0.35355338
    %v1290 = vadd.f32 %v1288, %v1110
    %v1291 = vadd.f32 %v1289, %v1111
    %v1292 = vsel %vm408, %v1290, -inf
    %1293 = vmax.xlane.f32.xlu0 %v1292
    %v1294 = vpop.xlane.xlu0 %1293
    %v1295 = vsel %vm408, %v1291, -inf
    %1296 = vmax.xlane.f32.xlu0 %v1295
    %v1297 = vpop.xlane.xlu0 %1296
    %v1298 = vsub.f32 %v1290, %v1294
    %v1299 = vsub.f32 %v1291, %v1297
    %v1300 = vmul.f32 %v1298, 1.442695
    %v1301 = vpow.pop %v1300
    %v1302 = vmul.f32 %v1299, 1.442695
    %v1303 = vpow.pop %v1302
    %v1304 = vsel %vm408, %v1301, 0.0
    %1305 = vadd.xlane.f32.xlu0 %v1304
    %v1306 = vpop.xlane.xlu0 %1305
    %v1307 = vsel %vm408, %v1303, 0.0
    %1308 = vadd.xlane.f32.xlu0 %v1307
    %v1309 = vpop.xlane.xlu0 %1308
    %v1310 = vrcp.pop %v1306
    %v1311 = vrcp.pop %v1309
    %v1312 = vmul.f32 %v1301, %v1310
    %v1313 = vmul.f32 %v1303, %v1311
    %v1314 = vpack.c.bf16 %v1312, %v1312
    %v1315 = vpack.c.bf16 %v1313, %v1313
    %1316 = vrot.lane.b32.xlu0 %v1188, 88
    %v1317 = vpop.permute.xlu0 %1316
    %v1319 = vsel %vm408, %v1314, 0
    %v1322 = vsel %vm485, %v1317, 0
    %1324 = vmatpush.bf16.msra.mxu0 0
    %1325 = vmatpush.bf16.msra.mxu0 0
    %1326 = vmatpush.bf16.msra.mxu0 0
    %1327 = vmatpush.bf16.msra.mxu0 0
    %1328 = vmatpush.bf16.msra.mxu0 0
    %1329 = vmatpush.bf16.msra.mxu0 0
    %1330 = vmatpush.bf16.msra.mxu0 0
    %1331 = vmatpush.bf16.msra.mxu0 %v1322
    %1332 = vmatmul.bf16.gmra.mxu0 %v1319
    %v1333 = vpop.f32.mrf.mxu0
    %v1334 = vadd.f32 0.0, %v1333
    %v1335 = vpop.f32.mrf.mxu0
    %1336 = vdwg.mxu0
    %1337 = vrot.lane.b32.xlu0 %v1212, 88
    %v1338 = vpop.permute.xlu0 %1337
    %v1340 = vsel %vm408, %v1315, 0
    %v1343 = vsel %vm485, %v1338, 0
    %1345 = vmatpush.bf16.msra.mxu0 0
    %1346 = vmatpush.bf16.msra.mxu0 0
    %1347 = vmatpush.bf16.msra.mxu0 0
    %1348 = vmatpush.bf16.msra.mxu0 0
    %1349 = vmatpush.bf16.msra.mxu0 0
    %1350 = vmatpush.bf16.msra.mxu0 0
    %1351 = vmatpush.bf16.msra.mxu0 0
    %1352 = vmatpush.bf16.msra.mxu0 %v1343
    %1353 = vmatmul.bf16.gmra.mxu0 %v1340
    %v1354 = vpop.f32.mrf.mxu0
    %v1355 = vadd.f32 0.0, %v1354
    %v1356 = vpop.f32.mrf.mxu0
    %1357 = vdwg.mxu0
    %v1358 = vpack.c.bf16 %v1113, %v1113
    %v1359 = vpack.c.bf16 %v1355, %v1334
    %v1361 = vsel %vm408, %v1359, 0
    %v1364 = vsel %vm485, %v1358, 0
    %1366 = vmatpush.bf16.msra.mxu0 0
    %1367 = vmatpush.bf16.msra.mxu0 0
    %1368 = vmatpush.bf16.msra.mxu0 0
    %1369 = vmatpush.bf16.msra.mxu0 0
    %1370 = vmatpush.bf16.msra.mxu0 0
    %1371 = vmatpush.bf16.msra.mxu0 0
    %1372 = vmatpush.bf16.msra.mxu0 0
    %1373 = vmatpush.bf16.msra.mxu0 %v1364
    %1374 = vmatmul.bf16.gmra.mxu0 %v1361
    %v1375 = vpop.f32.mrf.mxu0
    %v1376 = vadd.f32 0.0, %v1375
    %v1377 = vpop.f32.mrf.mxu0
    %v1378 = vadd.f32 0.0, %v1377
    %1379 = vdwg.mxu0
    %v1381 = vsel %vm408, %v1235, 0
    %v1384 = vsel %vm485, %v1234, 0
    %1386 = vmatpush.bf16.msra.mxu0 0
    %1387 = vmatpush.bf16.msra.mxu0 0
    %1388 = vmatpush.bf16.msra.mxu0 0
    %1389 = vmatpush.bf16.msra.mxu0 0
    %1390 = vmatpush.bf16.msra.mxu0 0
    %1391 = vmatpush.bf16.msra.mxu0 0
    %1392 = vmatpush.bf16.msra.mxu0 0
    %1393 = vmatpush.bf16.msra.mxu0 %v1384
    %1394 = vmatmul.bf16.gmra.mxu0 %v1381
    %v1395 = vpop.f32.mrf.mxu0
    %v1396 = vadd.f32 %v1376, %v1395
    %v1397 = vpop.f32.mrf.mxu0
    %v1398 = vadd.f32 %v1378, %v1397
    %1399 = vdwg.mxu0
    %1400 = vrot.lane.b32.xlu0 %v1238, 112
    %v1401 = vpop.permute.xlu0 %1400
    %1402 = vrot.lane.b32.xlu0 %v1188, 112
    %v1403 = vpop.permute.xlu0 %1402
    %v1405 = vsel %vm408, %v1401, 0
    %v1408 = vsel %vm408, %v1403, 0
    %1410 = vmatpush.bf16.xpose.msra.mxu0 0
    %1411 = vmatpush.bf16.xpose.msra.mxu0 0
    %1412 = vmatpush.bf16.xpose.msra.mxu0 0
    %1413 = vmatpush.bf16.xpose.msra.mxu0 0
    %1414 = vmatpush.bf16.xpose.msra.mxu0 0
    %1415 = vmatpush.bf16.xpose.msra.mxu0 0
    %1416 = vmatpush.bf16.xpose.msra.mxu0 0
    %1417 = vmatpush.bf16.xpose.msra.mxu0 %v1408
    %1418 = vmatmul.bf16.gmra.mxu0 %v1405
    %v1419 = vpop.f32.mrf.mxu0
    %v1420 = vadd.f32 0.0, %v1419
    %v1421 = vpop.f32.mrf.mxu0
    %1422 = vdwg.mxu0
    %1423 = vrot.lane.b32.xlu0 %v1264, 112
    %v1424 = vpop.permute.xlu0 %1423
    %1425 = vrot.lane.b32.xlu0 %v1212, 112
    %v1426 = vpop.permute.xlu0 %1425
    %v1428 = vsel %vm408, %v1424, 0
    %v1431 = vsel %vm408, %v1426, 0
    %1433 = vmatpush.bf16.xpose.msra.mxu0 0
    %1434 = vmatpush.bf16.xpose.msra.mxu0 0
    %1435 = vmatpush.bf16.xpose.msra.mxu0 0
    %1436 = vmatpush.bf16.xpose.msra.mxu0 0
    %1437 = vmatpush.bf16.xpose.msra.mxu0 0
    %1438 = vmatpush.bf16.xpose.msra.mxu0 0
    %1439 = vmatpush.bf16.xpose.msra.mxu0 0
    %1440 = vmatpush.bf16.xpose.msra.mxu0 %v1431
    %1441 = vmatmul.bf16.gmra.mxu0 %v1428
    %v1442 = vpop.f32.mrf.mxu0
    %v1443 = vadd.f32 0.0, %v1442
    %v1444 = vpop.f32.mrf.mxu0
    %1445 = vdwg.mxu0
    %v1446 = vmul.f32 %v1420, 0.35355338
    %v1447 = vmul.f32 %v1443, 0.35355338
    %v1448 = vadd.f32 %v1446, %v1110
    %v1449 = vadd.f32 %v1447, %v1111
    %v1450 = vsel %vm408, %v1448, -inf
    %1451 = vmax.xlane.f32.xlu0 %v1450
    %v1452 = vpop.xlane.xlu0 %1451
    %v1453 = vsel %vm408, %v1449, -inf
    %1454 = vmax.xlane.f32.xlu0 %v1453
    %v1455 = vpop.xlane.xlu0 %1454
    %v1456 = vsub.f32 %v1448, %v1452
    %v1457 = vsub.f32 %v1449, %v1455
    %v1458 = vmul.f32 %v1456, 1.442695
    %v1459 = vpow.pop %v1458
    %v1460 = vmul.f32 %v1457, 1.442695
    %v1461 = vpow.pop %v1460
    %v1462 = vsel %vm408, %v1459, 0.0
    %1463 = vadd.xlane.f32.xlu0 %v1462
    %v1464 = vpop.xlane.xlu0 %1463
    %v1465 = vsel %vm408, %v1461, 0.0
    %1466 = vadd.xlane.f32.xlu0 %v1465
    %v1467 = vpop.xlane.xlu0 %1466
    %v1468 = vrcp.pop %v1464
    %v1469 = vrcp.pop %v1467
    %v1470 = vmul.f32 %v1459, %v1468
    %v1471 = vmul.f32 %v1461, %v1469
    %v1472 = vpack.c.bf16 %v1470, %v1470
    %v1473 = vpack.c.bf16 %v1471, %v1471
    %1474 = vrot.lane.b32.xlu0 %v1188, 80
    %v1475 = vpop.permute.xlu0 %1474
    %v1477 = vsel %vm408, %v1472, 0
    %v1480 = vsel %vm485, %v1475, 0
    %1482 = vmatpush.bf16.msra.mxu0 0
    %1483 = vmatpush.bf16.msra.mxu0 0
    %1484 = vmatpush.bf16.msra.mxu0 0
    %1485 = vmatpush.bf16.msra.mxu0 0
    %1486 = vmatpush.bf16.msra.mxu0 0
    %1487 = vmatpush.bf16.msra.mxu0 0
    %1488 = vmatpush.bf16.msra.mxu0 0
    %1489 = vmatpush.bf16.msra.mxu0 %v1480
    %1490 = vmatmul.bf16.gmra.mxu0 %v1477
    %v1491 = vpop.f32.mrf.mxu0
    %v1492 = vadd.f32 0.0, %v1491
    %v1493 = vpop.f32.mrf.mxu0
    %1494 = vdwg.mxu0
    %1495 = vrot.lane.b32.xlu0 %v1212, 80
    %v1496 = vpop.permute.xlu0 %1495
    %v1498 = vsel %vm408, %v1473, 0
    %v1501 = vsel %vm485, %v1496, 0
    %1503 = vmatpush.bf16.msra.mxu0 0
    %1504 = vmatpush.bf16.msra.mxu0 0
    %1505 = vmatpush.bf16.msra.mxu0 0
    %1506 = vmatpush.bf16.msra.mxu0 0
    %1507 = vmatpush.bf16.msra.mxu0 0
    %1508 = vmatpush.bf16.msra.mxu0 0
    %1509 = vmatpush.bf16.msra.mxu0 0
    %1510 = vmatpush.bf16.msra.mxu0 %v1501
    %1511 = vmatmul.bf16.gmra.mxu0 %v1498
    %v1512 = vpop.f32.mrf.mxu0
    %v1513 = vadd.f32 0.0, %v1512
    %v1514 = vpop.f32.mrf.mxu0
    %1515 = vdwg.mxu0
    %v1516 = vpack.c.bf16 %v1114, %v1114
    %v1517 = vpack.c.bf16 %v1513, %v1492
    %v1519 = vsel %vm408, %v1517, 0
    %v1522 = vsel %vm485, %v1516, 0
    %1524 = vmatpush.bf16.msra.mxu0 0
    %1525 = vmatpush.bf16.msra.mxu0 0
    %1526 = vmatpush.bf16.msra.mxu0 0
    %1527 = vmatpush.bf16.msra.mxu0 0
    %1528 = vmatpush.bf16.msra.mxu0 0
    %1529 = vmatpush.bf16.msra.mxu0 0
    %1530 = vmatpush.bf16.msra.mxu0 0
    %1531 = vmatpush.bf16.msra.mxu0 %v1522
    %1532 = vmatmul.bf16.gmra.mxu0 %v1519
    %v1533 = vpop.f32.mrf.mxu0
    %v1534 = vadd.f32 0.0, %v1533
    %v1535 = vpop.f32.mrf.mxu0
    %v1536 = vadd.f32 0.0, %v1535
    %1537 = vdwg.mxu0
    %v1538 = vadd.f32 %v1396, %v1534
    %v1539 = vadd.f32 %v1398, %v1536
    %1540 = vrot.lane.b32.xlu0 %v1238, 104
    %v1541 = vpop.permute.xlu0 %1540
    %1542 = vrot.lane.b32.xlu0 %v1188, 104
    %v1543 = vpop.permute.xlu0 %1542
    %v1545 = vsel %vm408, %v1541, 0
    %v1548 = vsel %vm408, %v1543, 0
    %1550 = vmatpush.bf16.xpose.msra.mxu0 0
    %1551 = vmatpush.bf16.xpose.msra.mxu0 0
    %1552 = vmatpush.bf16.xpose.msra.mxu0 0
    %1553 = vmatpush.bf16.xpose.msra.mxu0 0
    %1554 = vmatpush.bf16.xpose.msra.mxu0 0
    %1555 = vmatpush.bf16.xpose.msra.mxu0 0
    %1556 = vmatpush.bf16.xpose.msra.mxu0 0
    %1557 = vmatpush.bf16.xpose.msra.mxu0 %v1548
    %1558 = vmatmul.bf16.gmra.mxu0 %v1545
    %v1559 = vpop.f32.mrf.mxu0
    %v1560 = vadd.f32 0.0, %v1559
    %v1561 = vpop.f32.mrf.mxu0
    %1562 = vdwg.mxu0
    %1563 = vrot.lane.b32.xlu0 %v1264, 104
    %v1564 = vpop.permute.xlu0 %1563
    %1565 = vrot.lane.b32.xlu0 %v1212, 104
    %v1566 = vpop.permute.xlu0 %1565
    %v1568 = vsel %vm408, %v1564, 0
    %v1571 = vsel %vm408, %v1566, 0
    %1573 = vmatpush.bf16.xpose.msra.mxu0 0
    %1574 = vmatpush.bf16.xpose.msra.mxu0 0
    %1575 = vmatpush.bf16.xpose.msra.mxu0 0
    %1576 = vmatpush.bf16.xpose.msra.mxu0 0
    %1577 = vmatpush.bf16.xpose.msra.mxu0 0
    %1578 = vmatpush.bf16.xpose.msra.mxu0 0
    %1579 = vmatpush.bf16.xpose.msra.mxu0 0
    %1580 = vmatpush.bf16.xpose.msra.mxu0 %v1571
    %1581 = vmatmul.bf16.gmra.mxu0 %v1568
    %v1582 = vpop.f32.mrf.mxu0
    %v1583 = vadd.f32 0.0, %v1582
    %v1584 = vpop.f32.mrf.mxu0
    %1585 = vdwg.mxu0
    %v1586 = vmul.f32 %v1560, 0.35355338
    %v1587 = vmul.f32 %v1583, 0.35355338
    %v1588 = vadd.f32 %v1586, %v1110
    %v1589 = vadd.f32 %v1587, %v1111
    %v1590 = vsel %vm408, %v1588, -inf
    %1591 = vmax.xlane.f32.xlu0 %v1590
    %v1592 = vpop.xlane.xlu0 %1591
    %v1593 = vsel %vm408, %v1589, -inf
    %1594 = vmax.xlane.f32.xlu0 %v1593
    %v1595 = vpop.xlane.xlu0 %1594
    %v1596 = vsub.f32 %v1588, %v1592
    %v1597 = vsub.f32 %v1589, %v1595
    %v1598 = vmul.f32 %v1596, 1.442695
    %v1599 = vpow.pop %v1598
    %v1600 = vmul.f32 %v1597, 1.442695
    %v1601 = vpow.pop %v1600
    %v1602 = vsel %vm408, %v1599, 0.0
    %1603 = vadd.xlane.f32.xlu0 %v1602
    %v1604 = vpop.xlane.xlu0 %1603
    %v1605 = vsel %vm408, %v1601, 0.0
    %1606 = vadd.xlane.f32.xlu0 %v1605
    %v1607 = vpop.xlane.xlu0 %1606
    %v1608 = vrcp.pop %v1604
    %v1609 = vrcp.pop %v1607
    %v1610 = vmul.f32 %v1599, %v1608
    %v1611 = vmul.f32 %v1601, %v1609
    %v1612 = vpack.c.bf16 %v1610, %v1610
    %v1613 = vpack.c.bf16 %v1611, %v1611
    %1614 = vrot.lane.b32.xlu0 %v1188, 72
    %v1615 = vpop.permute.xlu0 %1614
    %v1617 = vsel %vm408, %v1612, 0
    %v1620 = vsel %vm485, %v1615, 0
    %1622 = vmatpush.bf16.msra.mxu0 0
    %1623 = vmatpush.bf16.msra.mxu0 0
    %1624 = vmatpush.bf16.msra.mxu0 0
    %1625 = vmatpush.bf16.msra.mxu0 0
    %1626 = vmatpush.bf16.msra.mxu0 0
    %1627 = vmatpush.bf16.msra.mxu0 0
    %1628 = vmatpush.bf16.msra.mxu0 0
    %1629 = vmatpush.bf16.msra.mxu0 %v1620
    %1630 = vmatmul.bf16.gmra.mxu0 %v1617
    %v1631 = vpop.f32.mrf.mxu0
    %v1632 = vadd.f32 0.0, %v1631
    %v1633 = vpop.f32.mrf.mxu0
    %1634 = vdwg.mxu0
    %1635 = vrot.lane.b32.xlu0 %v1212, 72
    %v1636 = vpop.permute.xlu0 %1635
    %v1638 = vsel %vm408, %v1613, 0
    %v1641 = vsel %vm485, %v1636, 0
    %1643 = vmatpush.bf16.msra.mxu0 0
    %1644 = vmatpush.bf16.msra.mxu0 0
    %1645 = vmatpush.bf16.msra.mxu0 0
    %1646 = vmatpush.bf16.msra.mxu0 0
    %1647 = vmatpush.bf16.msra.mxu0 0
    %1648 = vmatpush.bf16.msra.mxu0 0
    %1649 = vmatpush.bf16.msra.mxu0 0
    %1650 = vmatpush.bf16.msra.mxu0 %v1641
    %1651 = vmatmul.bf16.gmra.mxu0 %v1638
    %v1652 = vpop.f32.mrf.mxu0
    %v1653 = vadd.f32 0.0, %v1652
    %v1654 = vpop.f32.mrf.mxu0
    %1655 = vdwg.mxu0
    %v1656 = vpack.c.bf16 %v1115, %v1115
    %v1657 = vpack.c.bf16 %v1653, %v1632
    %v1659 = vsel %vm408, %v1657, 0
    %v1662 = vsel %vm485, %v1656, 0
    %1664 = vmatpush.bf16.msra.mxu0 0
    %1665 = vmatpush.bf16.msra.mxu0 0
    %1666 = vmatpush.bf16.msra.mxu0 0
    %1667 = vmatpush.bf16.msra.mxu0 0
    %1668 = vmatpush.bf16.msra.mxu0 0
    %1669 = vmatpush.bf16.msra.mxu0 0
    %1670 = vmatpush.bf16.msra.mxu0 0
    %1671 = vmatpush.bf16.msra.mxu0 %v1662
    %1672 = vmatmul.bf16.gmra.mxu0 %v1659
    %v1673 = vpop.f32.mrf.mxu0
    %v1674 = vadd.f32 0.0, %v1673
    %v1675 = vpop.f32.mrf.mxu0
    %v1676 = vadd.f32 0.0, %v1675
    %1677 = vdwg.mxu0
    %v1678 = vadd.f32 %v1538, %v1674
    %v1679 = vadd.f32 %v1539, %v1676
    %v1680 = vld [vmem:[#allocation20] sm:$0x1]
    %v1682 = vperm.slane %v1680, 0
    %v1684 = vadd.f32 %v1678, %v1682
    %v1685 = vadd.f32 %v1679, %v1682
    %v1686 = vadd.f32 %v1032, %v1684
    %v1687 = vadd.f32 %v1033, %v1685
    %v1688 = vsel %vm377, %v1686, 0.0
    %1689 = vadd.xlane.f32.xlu0 %v1688
    %v1690 = vpop.xlane.xlu0 %1689
    %v1691 = vsel %vm377, %v1687, 0.0
    %1692 = vadd.xlane.f32.xlu0 %v1691
    %v1693 = vpop.xlane.xlu0 %1692
    %v1694 = vmul.f32 %v1690, %v983
    %v1695 = vmul.f32 %v1693, %v983
    %v1696 = vsub.f32 %v1686, %v1694
    %v1697 = vsub.f32 %v1687, %v1695
    %v1698 = vmul.f32 %v1696, %v1696
    %v1699 = vmul.f32 %v1697, %v1697
    %v1700 = vsel %vm377, %v1698, 0.0
    %1701 = vadd.xlane.f32.xlu0 %v1700
    %v1702 = vpop.xlane.xlu0 %1701
    %v1703 = vsel %vm377, %v1699, 0.0
    %1704 = vadd.xlane.f32.xlu0 %v1703
    %v1705 = vpop.xlane.xlu0 %1704
    %v1706 = vmul.f32 %v1702, %v983
    %v1707 = vmul.f32 %v1705, %v983
    %v1708 = vadd.f32 %v1706, 1e-05
    %v1709 = vadd.f32 %v1707, 1e-05
    %v1710 = vrsqrt.pop %v1708
    %v1711 = vmul.f32 %v1710, %v1708
    %v1712 = vmul.f32 %v1711, %v1710
    %v1713 = vmul.f32 0.5, %v1712
    %v1714 = vsub.f32 1.5, %v1713
    %v1715 = vmul.f32 %v1710, %v1714
    %vm1716 = vweird.f32 %v1708
    %vm1717 = vweird.f32 %v1710
    %vm1718 = vmor %vm1716, %vm1717
    %v1719 = vsel %vm1718, %v1710, %v1715
    %v1720 = vrsqrt.pop %v1709
    %v1721 = vmul.f32 %v1720, %v1709
    %v1722 = vmul.f32 %v1721, %v1720
    %v1723 = vmul.f32 0.5, %v1722
    %v1724 = vsub.f32 1.5, %v1723
    %v1725 = vmul.f32 %v1720, %v1724
    %vm1726 = vweird.f32 %v1709
    %vm1727 = vweird.f32 %v1720
    %vm1728 = vmor %vm1726, %vm1727
    %v1729 = vsel %vm1728, %v1720, %v1725
    %v1730 = vmul.f32 %v1696, %v1719
    %v1731 = vmul.f32 %v1697, %v1729
    %v1732 = vld [vmem:[%s20] sm:$0x1]
    %v1734 = vperm.slane %v1732, 0
    %v1736 = vmul.f32 %v1730, %v1734
    %v1737 = vmul.f32 %v1731, %v1734
    %v1738 = vld [vmem:[#allocation29] sm:$0x1]
    %v1740 = vperm.slane %v1738, 0
    %v1742 = vadd.f32 %v1736, %v1740
    %v1743 = vadd.f32 %v1737, %v1740
    %v1744 = vpack.c.bf16 %v1743, %v1742
    %v1745 = vld [vmem:[#allocation22] sm:$0xf]
    %v1746 = vld [vmem:[#allocation22 + $0x4] sm:$0xf]
    %v1747 = vld [vmem:[#allocation22 + $0x8] sm:$0xf]
    %v1748 = vld [vmem:[#allocation22 + $0xc] sm:$0xf]
    %v1749 = vld [vmem:[#allocation23] sm:$0x1]
    %v1751 = vperm.slane %v1749, 0
    %v1757 = vunpack.c.l.b16 %v1745
    %v1758 = vunpack.c.l.b16 %v1746
    %v1759 = vunpack.c.l.b16 %v1747
    %v1760 = vunpack.c.l.b16 %v1748
    %v1761 = vpack.c.b16 %v1758, %v1757
    %v1762 = vpack.c.b16 %v1760, %v1759
    %v1766 = vsel %vm377, %v1744, 0
    %1768 = vmatpush.bf16.msra.mxu0 0
    %1769 = vmatpush.bf16.msra.mxu0 0
    %1770 = vmatpush.bf16.msra.mxu0 0
    %1771 = vmatpush.bf16.msra.mxu0 0
    %1772 = vmatpush.bf16.msra.mxu0 0
    %1773 = vmatpush.bf16.msra.mxu0 0
    %1774 = vmatpush.bf16.msra.mxu0 %v1762
    %1775 = vmatpush.bf16.msra.mxu0 %v1761
    %1776 = vmatmul.bf16.gmra.mxu0 %v1766
    %v1777 = vpop.f32.mrf.mxu0
    %v1778 = vadd.f32 %v1751, %v1777
    %v1779 = vpop.f32.mrf.mxu0
    %v1780 = vadd.f32 %v1751, %v1779
    %1781 = vdwg.mxu0
    %v1782 = vmax.f32 %v1778, 0.0
    %v1783 = vmax.f32 %v1780, 0.0
    %v1784 = vpack.c.bf16 %v1783, %v1782
    %v1785 = vld [vmem:[%s16] sm:$0xf]
    %v1786 = vld [vmem:[%s16 + $0x4] sm:$0xf]
    %v1787 = vld [vmem:[%s16 + $0x8] sm:$0xf]
    %v1788 = vld [vmem:[%s16 + $0xc] sm:$0xf]
    %v1789 = vld [vmem:[%s16 + $0x10] sm:$0xf]
    %v1790 = vld [vmem:[%s16 + $0x14] sm:$0xf]
    %v1791 = vld [vmem:[%s16 + $0x18] sm:$0xf]
    %v1792 = vld [vmem:[%s16 + $0x1c] sm:$0xf]
    %v1793 = vld [vmem:[#allocation25] sm:$0x1]
    %v1795 = vperm.slane %v1793, 0
    %v1805 = vunpack.c.l.b16 %v1785
    %v1806 = vunpack.c.l.b16 %v1786
    %v1807 = vunpack.c.l.b16 %v1787
    %v1808 = vunpack.c.l.b16 %v1788
    %v1809 = vunpack.c.l.b16 %v1789
    %v1810 = vunpack.c.l.b16 %v1790
    %v1811 = vunpack.c.l.b16 %v1791
    %v1812 = vunpack.c.l.b16 %v1792
    %v1813 = vpack.c.b16 %v1806, %v1805
    %v1814 = vpack.c.b16 %v1808, %v1807
    %v1815 = vpack.c.b16 %v1810, %v1809
    %v1816 = vpack.c.b16 %v1812, %v1811
    %vm1821 = vcmask 523264
    %v1823 = vsel %vm1821, %v1784, 0
    %1825 = vmatpush.bf16.msra.mxu0 0
    %1826 = vmatpush.bf16.msra.mxu0 0
    %1827 = vmatpush.bf16.msra.mxu0 0
    %1828 = vmatpush.bf16.msra.mxu0 0
    %1829 = vmatpush.bf16.msra.mxu0 %v1816
    %1830 = vmatpush.bf16.msra.mxu0 %v1815
    %1831 = vmatpush.bf16.msra.mxu0 %v1814
    %1832 = vmatpush.bf16.msra.mxu0 %v1813
    %1833 = vmatmul.bf16.gmra.mxu0 %v1823
    %v1834 = vpop.f32.mrf.mxu0
    %v1835 = vadd.f32 %v1795, %v1834
    %v1836 = vpop.f32.mrf.mxu0
    %v1837 = vadd.f32 %v1795, %v1836
    %1838 = vdwg.mxu0
    %v1839 = vsel %vm377, %v1742, 0.0
    %1840 = vadd.xlane.f32.xlu0 %v1839
    %v1841 = vpop.xlane.xlu0 %1840
    %v1842 = vsel %vm377, %v1743, 0.0
    %1843 = vadd.xlane.f32.xlu0 %v1842
    %v1844 = vpop.xlane.xlu0 %1843
    %v1845 = vmul.f32 %v1841, %v983
    %v1846 = vmul.f32 %v1844, %v983
    %v1847 = vsub.f32 %v1742, %v1845
    %v1848 = vsub.f32 %v1743, %v1846
    %v1849 = vmul.f32 %v1847, %v1847
    %v1850 = vmul.f32 %v1848, %v1848
    %v1851 = vsel %vm377, %v1849, 0.0
    %1852 = vadd.xlane.f32.xlu0 %v1851
    %v1853 = vpop.xlane.xlu0 %1852
    %v1854 = vsel %vm377, %v1850, 0.0
    %1855 = vadd.xlane.f32.xlu0 %v1854
    %v1856 = vpop.xlane.xlu0 %1855
    %v1857 = vmul.f32 %v1853, %v983
    %v1858 = vmul.f32 %v1856, %v983
    %v1859 = vadd.f32 %v1857, 1e-05
    %v1860 = vadd.f32 %v1858, 1e-05
    %v1861 = vrsqrt.pop %v1859
    %v1862 = vmul.f32 %v1861, %v1859
    %v1863 = vmul.f32 %v1862, %v1861
    %v1864 = vmul.f32 0.5, %v1863
    %v1865 = vsub.f32 1.5, %v1864
    %v1866 = vmul.f32 %v1861, %v1865
    %vm1867 = vweird.f32 %v1859
    %vm1868 = vweird.f32 %v1861
    %vm1869 = vmor %vm1867, %vm1868
    %v1870 = vsel %vm1869, %v1861, %v1866
    %v1871 = vrsqrt.pop %v1860
    %v1872 = vmul.f32 %v1871, %v1860
    %v1873 = vmul.f32 %v1872, %v1871
    %v1874 = vmul.f32 0.5, %v1873
    %v1875 = vsub.f32 1.5, %v1874
    %v1876 = vmul.f32 %v1871, %v1875
    %vm1877 = vweird.f32 %v1860
    %vm1878 = vweird.f32 %v1871
    %vm1879 = vmor %vm1877, %vm1878
    %v1880 = vsel %vm1879, %v1871, %v1876
    %v1881 = vmul.f32 %v1847, %v1870
    %v1882 = vmul.f32 %v1848, %v1880
    %v1883 = vld [vmem:[%s22] sm:$0x1]
    %v1885 = vperm.slane %v1883, 0
    %v1887 = vmul.f32 %v1881, %v1885
    %v1888 = vmul.f32 %v1882, %v1885
    %v1889 = vld [vmem:[#allocation31] sm:$0x1]
    %v1891 = vperm.slane %v1889, 0
    %v1893 = vadd.f32 %v1887, %v1891
    %v1894 = vadd.f32 %v1888, %v1891
    %v1895 = vadd.f32 %v1893, %v1835
    %v1896 = vadd.f32 %v1894, %v1837
    %1897 = vst.msk [vmem:[#allocation32] sm:$0xff] %vm377, %v1895
    %1898 = vst.msk [vmem:[#allocation32 + $0x8] sm:$0xff] %vm377, %v1896
    // Predicated region
    $region174: #{decoder_layer.1} parent=1 // pred_check
      _
    $region175: #{decoder_layer.1} parent=1 // pred_check_branch
      %1900 = sbr.rel (0) target = $region177
    $region176: #{decoder_layer.1} parent=1 // pred_region
      %1902 = vsyncadd [#allocation4], 0
      %s1903 = sshll.u32 [#allocation32], 4
      %s1904 = int_to_ptr.vmem [resolvable:$true] %s1903
      %s1905 = sshll.u32 %s24, 4
      %s1906 = int_to_ptr.hbm [resolvable:$true] %s1905
      %1911 = dma.vmem_to_hbm [thread:$0]  %s1904, 256, %s1906, [#allocation4], 128, 128, 8
    $region177: #{decoder_layer.1} parent=1 // pred_fallthru
      _
    // Predicated region
    $region178: #{decoder_layer.1} parent=1 // pred_check
      _
    $region179: #{decoder_layer.1} parent=1 // pred_check_branch
      %1913 = sbr.rel (0) target = $region181
    $region180: #{decoder_layer.1} parent=1 // pred_region
      %1915 = dma.done [#allocation4], 256
    $region181: #{decoder_layer.1} parent=1 // pred_fallthru
      _
    %1916 = vsyncpa [#allocation3], 1
    %1917 = vsyncpa [#allocation6], 1
    %1918 = vsyncpa [#allocation9], 1
    %1919 = vsyncpa [#allocation12], 1
    %1920 = vsyncpa [#allocation15], 1
    %1921 = vsyncpa [#allocation18], 1
    %1922 = vsyncpa [#allocation21], 1
    %1923 = vsyncpa [#allocation24], 1
    %1924 = vsyncpa [#allocation27], 1
    %1925 = vsyncpa [#allocation30], 1
    %1926 = vsyncpa [#allocation4], 1

</llo_original>
